<compile_context>
chip_gen: v6e
topology: v6e:2x2x1
jax: 0.10.0
libtpu: 0.0.40
codegen_flags: <defaults>
</compile_context>

<pallas_src>
import jax
import jax.numpy as jnp
from jax.experimental import pallas as pl
from jax.experimental.pallas import tpu as pltpu


# --------------------------------------------------------------------------- #
# Fused Pallas kernel (embedding gather + LSTM stack + classifier)
# --------------------------------------------------------------------------- #
def make_fused_kernel(T, B, E, H, num_layers, out_size):
    f32 = jnp.float32
    bf16 = jnp.bfloat16
    H2, H4, H8 = 2 * H, 4 * H, 8 * H

    def kernel(*refs):
        tok_ref = refs[0]                                   # SMEM (T, B) int32
        emb_ref = refs[1]                                   # (V, E) f32
        layer_refs = [refs[2 + 3 * l: 5 + 3 * l] for l in range(num_layers)]
        wcls_ref = refs[2 + 3 * num_layers]                 # (2H, out) bf16
        bcls_ref = refs[3 + 3 * num_layers]                 # (1, out) f32
        out_ref = refs[4 + 3 * num_layers]                  # (B, out) f32
        x0_scr = refs[5 + 3 * num_layers]                   # VMEM (T*B, E) f32

        # ---- fused embedding gather: token ids are scalar-prefetched ----
        for t in range(T):
            for b in range(B):
                tok = tok_ref[t, b]
                x0_scr[pl.ds(t * B + b, 1), :] = emb_ref[pl.ds(tok, 1), :]
        x_all = x0_scr[...]                                 # (T*B, E) f32

        # Hoisted lane masks (shared by every layer).
        col8 = jax.lax.broadcasted_iota(jnp.int32, (B, H8), 1)
        dir_mask = (col8 % H2) < H          # fwd-direction gate columns
        col2 = jax.lax.broadcasted_iota(jnp.int32, (B, H2), 1)
        half_mask = col2 < H                # fwd half of the fused feature dim

        logits = None
        for l in range(num_layers):
            wih_ref, whh_ref, b_ref = layer_refs[l]
            is_last = (l == num_layers - 1)

            # Batched input projection: all T timesteps, both directions,
            # one matmul (bf16 operands, f32 accumulate), one bias broadcast.
            gin_all = (jnp.dot(x_all.astype(bf16), wih_ref[...],
                               preferred_element_type=f32)
                       + b_ref[...])                        # (T*B, 8H) f32

            # Per-iteration fused gate inputs: fwd columns take time s,
            # bwd columns take time T-1-s (cheap VPU select, off the chain).
            gin_t = [gin_all[s * B:(s + 1) * B, :] for s in range(T)]
            gcat = [jnp.where(dir_mask, gin_t[s], gin_t[T - 1 - s])
                    for s in range(T)]

            whh_bd = whh_ref[...]                           # (2H, 8H) bf16

            # Fused recurrence: carry [h_f | h_b], one matmul per step.
            # TODO(synk): convert to lax.fori_loop + VMEM scratch for hs once
            # T grows (unrolled lists scale live vregs/VMEM linearly with T).
            h = jnp.zeros((B, H2), f32)
            c = jnp.zeros((B, H2), f32)
            hs = []
            for s in range(T):
                gates = gcat[s] + jnp.dot(h.astype(bf16), whh_bd,
                                          preferred_element_type=f32)
                # Column layout: [i_f,i_b | f_f,f_b | g_f,g_b | o_f,o_b]
                i_g = jax.nn.sigmoid(gates[:, 0:H2])
                f_g = jax.nn.sigmoid(gates[:, H2:H4])
                g_g = jnp.tanh(gates[:, H4:H4 + H2])
                o_g = jax.nn.sigmoid(gates[:, H4 + H2:H8])
                c = f_g * c + i_g * g_g
                h = o_g * jnp.tanh(c)
                hs.append(h)

            if is_last:
                # output[:, -1, :] = [fwd h at time T-1 | bwd h at time T-1];
                # bwd h at time T-1 was produced at iteration 0.
                cls_in = jnp.where(half_mask, hs[T - 1], hs[0])
                logits = (jnp.dot(cls_in.astype(bf16), wcls_ref[...],
                                  preferred_element_type=f32)
                          + bcls_ref[...])
            else:
                # Time-align fwd/bwd halves and stack for the next layer's
                # single batched input-projection matmul.
                x_next = [jnp.where(half_mask, hs[t], hs[T - 1 - t])
                          for t in range(T)]
                x_all = jnp.concatenate(x_next, axis=0)     # (T*B, 2H)

        out_ref[...] = logits.astype(out_ref.dtype)

    return kernel


def _full_spec(shape):
    nd = len(shape)
    return pl.BlockSpec(tuple(shape), lambda i, tok, _nd=nd: (0,) * _nd)


# --------------------------------------------------------------------------- #
# Parameters: PyTorch-equivalent init, plus kernel-friendly fused layouts
# (gate-reordered fused Wih, block-diagonal Whh, fused bias, bf16 MXU weights)
# precomputed ONCE here.  Original-layout f32 copies kept for the reference.
# --------------------------------------------------------------------------- #
def init_params(key, vocab_size, embedding_length, hidden_size, num_layers,
                output_size):
    H = hidden_size
    k = key

    def nxt():
        nonlocal k
        k, sub = jax.random.split(k)
        return sub

    emb = jax.random.normal(nxt(), (vocab_size, embedding_length), jnp.float32)

    stdv = 1.0 / float(H) ** 0.5
    ref_layers = []
    for layer in range(num_layers):
        in_size = embedding_length if layer == 0 else 2 * H
        dirs = []
        for _d in range(2):  # forward, backward
            wih = jax.random.uniform(nxt(), (4 * H, in_size),
                                     jnp.float32, -stdv, stdv)
            whh = jax.random.uniform(nxt(), (4 * H, H),
                                     jnp.float32, -stdv, stdv)
            bih = jax.random.uniform(nxt(), (4 * H,), jnp.float32, -stdv, stdv)
            bhh = jax.random.uniform(nxt(), (4 * H,), jnp.float32, -stdv, stdv)
            dirs.append(dict(wih_t=jnp.transpose(wih),          # (D, 4H)
                             whh_t=jnp.transpose(whh),          # (H, 4H)
                             bias=(bih + bhh).reshape(1, -1)))  # (1, 4H)
        ref_layers.append(dirs)

    kl = 1.0 / float(2 * H) ** 0.5
    label_w = jax.random.uniform(nxt(), (output_size, 2 * H),
                                 jnp.float32, -kl, kl)
    label_b = jax.random.uniform(nxt(), (output_size,), jnp.float32, -kl, kl)

    # ---- kernel layouts ---------------------------------------------------
    def fuse_gate_cols(wf, wb):
        # (D,4H)+(D,4H) -> (D,8H) columns [i_f,i_b | f_f,f_b | g_f,g_b | o_f,o_b]
        blocks = []
        for g in range(4):
            blocks.append(wf[:, g * H:(g + 1) * H])
            blocks.append(wb[:, g * H:(g + 1) * H])
        return jnp.concatenate(blocks, axis=-1)

    klayers = []
    for dirs in ref_layers:
        f, b = dirs
        wih_fused = fuse_gate_cols(f["wih_t"], b["wih_t"]).astype(jnp.bfloat16)
        zer = jnp.zeros((H, H), jnp.float32)
        blocks = []
        for g in range(4):
            top = jnp.concatenate([f["whh_t"][:, g * H:(g + 1) * H], zer], -1)
            bot = jnp.concatenate([zer, b["whh_t"][:, g * H:(g + 1) * H]], -1)
            blocks.append(jnp.concatenate([top, bot], axis=0))   # (2H, 2H)
        whh_bd = jnp.concatenate(blocks, axis=-1).astype(jnp.bfloat16)
        bias_fused = fuse_gate_cols(f["bias"], b["bias"])        # (1, 8H) f32
        klayers.append(dict(wih=wih_fused, whh_bd=whh_bd, bias=bias_fused))

    return dict(
        embedding=emb,
        kernel_layers=klayers,
        wcls=jnp.transpose(label_w).astype(jnp.bfloat16),        # (2H, out)
        bcls=label_b.reshape(1, -1),                             # (1, out)
        ref_layers=ref_layers,
        ref_label_w_t=jnp.transpose(label_w),
        ref_label_b=label_b.reshape(1, -1),
    )


# --------------------------------------------------------------------------- #
# Forward pass: ONE fused pallas_call (embedding gather included)
# --------------------------------------------------------------------------- #
def forward(params, input_sentence):
    tokens = input_sentence.astype(jnp.int32)
    T, B = tokens.shape                      # time = N (permute quirk), batch = S
    V, E = params["embedding"].shape
    H = params["kernel_layers"][0]["whh_bd"].shape[0] // 2
    out_size = params["wcls"].shape[1]
    num_layers = len(params["kernel_layers"])

    args = [params["embedding"]]
    for lp in params["kernel_layers"]:
        args += [lp["wih"], lp["whh_bd"], lp["bias"]]
    args += [params["wcls"], params["bcls"]]
    in_specs = [_full_spec(a.shape) for a in args]

    kernel = make_fused_kernel(T, B, E, H, num_layers, out_size)

    # TODO(synk): for a real multi-sentence workload, add a leading "parallel"
    # grid axis over independent batches so v7x's two TensorCores both work.
    return pl.pallas_call(
        kernel,
        out_shape=jax.ShapeDtypeStruct((B, out_size), jnp.float32),
        grid_spec=pltpu.PrefetchScalarGridSpec(
            num_scalar_prefetch=1,           # token ids -> SMEM
            grid=(1,),                       # single invocation; all in VMEM
            in_specs=in_specs,
            out_specs=pl.BlockSpec((B, out_size), lambda i, tok: (0, 0)),
            scratch_shapes=[pltpu.VMEM((T * B, E), jnp.float32)],
        ),
        compiler_params=pltpu.CompilerParams(
            dimension_semantics=("arbitrary",),
            vmem_limit_bytes=32 * 1024 * 1024,
        ),
    )(tokens, *args)


# --------------------------------------------------------------------------- #
# Pure-JAX reference (original weight layout; weights rounded through bf16 to
# match the kernel's bf16 MXU weight storage)
# --------------------------------------------------------------------------- #
def forward_ref(params, input_sentence):
    def r(w):
        return w.astype(jnp.bfloat16).astype(jnp.float32)

    emb = jnp.take(params["embedding"], input_sentence, axis=0)  # (T, B, E)
    x = emb
    H = params["ref_layers"][0][0]["whh_t"].shape[0]
    for dirs in params["ref_layers"]:
        outs = []
        for d in range(2):
            wih_t, whh_t = r(dirs[d]["wih_t"]), r(dirs[d]["whh_t"])
            bias = dirs[d]["bias"]
            xs = x if d == 0 else x[::-1]
            B = x.shape[1]

            def step(carry, xt, wih_t=wih_t, whh_t=whh_t, bias=bias):
                h, c = carry
                gates = xt @ wih_t + h @ whh_t + bias
                i_g = jax.nn.sigmoid(gates[:, :H])
                f_g = jax.nn.sigmoid(gates[:, H:2 * H])
                g_g = jnp.tanh(gates[:, 2 * H:3 * H])
                o_g = jax.nn.sigmoid(gates[:, 3 * H:])
                c = f_g * c + i_g * g_g
                h = o_g * jnp.tanh(c)
                return (h, c), h

            init = (jnp.zeros((B, H), jnp.float32),
                    jnp.zeros((B, H), jnp.float32))
            _, hs = jax.lax.scan(step, init, xs)
            outs.append(hs if d == 0 else hs[::-1])
        x = jnp.concatenate(outs, axis=-1)
    return x[-1] @ r(params["ref_label_w_t"]) + params["ref_label_b"]


# --------------------------------------------------------------------------- #
if __name__ == "__main__":
    batch_size = 4        # N (becomes the LSTM "time" axis due to the permute)
    num_sequences = 4     # S (== N so the module's permute quirk is shape-consistent)
    vocab_size = 50
    embedding_length = 16
    hidden_size = 32
    num_layers = 2
    output_size = 2

    key = jax.random.PRNGKey(0)
    k_params, k_tokens = jax.random.split(key)
    params = init_params(k_params, vocab_size, embedding_length, hidden_size,
                         num_layers, output_size)
    tokens = jax.random.randint(k_tokens, (batch_size, num_sequences),
                                0, vocab_size, dtype=jnp.int32)

    logits = jax.block_until_ready(forward(params, tokens))
    ref = forward_ref(params, tokens)

    assert logits.shape == (num_sequences, output_size), logits.shape
    assert jnp.allclose(logits, ref, atol=2e-2, rtol=2e-2), (logits, ref)
    print("KERNEL_OK")
</pallas_src>

<mosaic_0001>
module attributes {stable_mosaic.version = 11 : i64} {
  func.func @kernel(%arg0: i32, %arg1: memref<4x4xi32, #tpu.memory_space<smem>>, %arg2: memref<50x16xf32, #tpu.memory_space<vmem>>, %arg3: memref<16x256xbf16, #tpu.memory_space<vmem>>, %arg4: memref<64x256xbf16, #tpu.memory_space<vmem>>, %arg5: memref<1x256xf32, #tpu.memory_space<vmem>>, %arg6: memref<64x256xbf16, #tpu.memory_space<vmem>>, %arg7: memref<64x256xbf16, #tpu.memory_space<vmem>>, %arg8: memref<1x256xf32, #tpu.memory_space<vmem>>, %arg9: memref<64x2xbf16, #tpu.memory_space<vmem>>, %arg10: memref<1x2xf32, #tpu.memory_space<vmem>>, %arg11: memref<4x2xf32, #tpu.memory_space<vmem>>, %arg12: memref<16x16xf32, #tpu.memory_space<vmem>>) attributes {dimension_semantics = [#tpu.dimension_semantics<arbitrary>], iteration_bounds = array<i64: 1>, scalar_prefetch = 1 : i64, scratch_operands = 1 : i64, tpu.core_type = #tpu.core_type<tc>, window_params = [{pipeline_mode = #tpu.pipeline_mode<synchronous>, transform_indices = @transform_0, window_bounds = array<i64: 50, 16>}, {pipeline_mode = #tpu.pipeline_mode<synchronous>, transform_indices = @transform_1, window_bounds = array<i64: 16, 256>}, {pipeline_mode = #tpu.pipeline_mode<synchronous>, transform_indices = @transform_2, window_bounds = array<i64: 64, 256>}, {pipeline_mode = #tpu.pipeline_mode<synchronous>, transform_indices = @transform_3, window_bounds = array<i64: 1, 256>}, {pipeline_mode = #tpu.pipeline_mode<synchronous>, transform_indices = @transform_4, window_bounds = array<i64: 64, 256>}, {pipeline_mode = #tpu.pipeline_mode<synchronous>, transform_indices = @transform_5, window_bounds = array<i64: 64, 256>}, {pipeline_mode = #tpu.pipeline_mode<synchronous>, transform_indices = @transform_6, window_bounds = array<i64: 1, 256>}, {pipeline_mode = #tpu.pipeline_mode<synchronous>, transform_indices = @transform_7, window_bounds = array<i64: 64, 2>}, {pipeline_mode = #tpu.pipeline_mode<synchronous>, transform_indices = @transform_8, window_bounds = array<i64: 1, 2>}, {pipeline_mode = #tpu.pipeline_mode<synchronous>, transform_indices = @transform_9, window_bounds = array<i64: 4, 2>}]} {
    %c0 = arith.constant 0 : index
    %c0_0 = arith.constant 0 : index
    %0 = memref.load %arg1[%c0, %c0_0] : memref<4x4xi32, #tpu.memory_space<smem>>
    %1 = arith.index_cast %0 : i32 to index
    %c0_1 = arith.constant 0 : index
    %2 = vector.load %arg2[%1, %c0_1] : memref<50x16xf32, #tpu.memory_space<vmem>>, vector<1x16xf32>
    %c0_2 = arith.constant 0 : index
    %c0_3 = arith.constant 0 : index
    %3 = vector.load %arg12[%c0_2, %c0_3] : memref<16x16xf32, #tpu.memory_space<vmem>>, vector<1x16xf32>
    tpu.vector_store %arg12[%c0_2, %c0_3], %2 {strides = array<i32>} : memref<16x16xf32, #tpu.memory_space<vmem>>, vector<1x16xf32>,
    %c0_4 = arith.constant 0 : index
    %c1 = arith.constant 1 : index
    %4 = memref.load %arg1[%c0_4, %c1] : memref<4x4xi32, #tpu.memory_space<smem>>
    %5 = arith.index_cast %4 : i32 to index
    %c0_5 = arith.constant 0 : index
    %6 = vector.load %arg2[%5, %c0_5] : memref<50x16xf32, #tpu.memory_space<vmem>>, vector<1x16xf32>
    %c1_6 = arith.constant 1 : index
    %c0_7 = arith.constant 0 : index
    %7 = vector.load %arg12[%c1_6, %c0_7] : memref<16x16xf32, #tpu.memory_space<vmem>>, vector<1x16xf32>
    tpu.vector_store %arg12[%c1_6, %c0_7], %6 {strides = array<i32>} : memref<16x16xf32, #tpu.memory_space<vmem>>, vector<1x16xf32>,
    %c0_8 = arith.constant 0 : index
    %c2 = arith.constant 2 : index
    %8 = memref.load %arg1[%c0_8, %c2] : memref<4x4xi32, #tpu.memory_space<smem>>
    %9 = arith.index_cast %8 : i32 to index
    %c0_9 = arith.constant 0 : index
    %10 = vector.load %arg2[%9, %c0_9] : memref<50x16xf32, #tpu.memory_space<vmem>>, vector<1x16xf32>
    %c2_10 = arith.constant 2 : index
    %c0_11 = arith.constant 0 : index
    %11 = vector.load %arg12[%c2_10, %c0_11] : memref<16x16xf32, #tpu.memory_space<vmem>>, vector<1x16xf32>
    tpu.vector_store %arg12[%c2_10, %c0_11], %10 {strides = array<i32>} : memref<16x16xf32, #tpu.memory_space<vmem>>, vector<1x16xf32>,
    %c0_12 = arith.constant 0 : index
    %c3 = arith.constant 3 : index
    %12 = memref.load %arg1[%c0_12, %c3] : memref<4x4xi32, #tpu.memory_space<smem>>
    %13 = arith.index_cast %12 : i32 to index
    %c0_13 = arith.constant 0 : index
    %14 = vector.load %arg2[%13, %c0_13] : memref<50x16xf32, #tpu.memory_space<vmem>>, vector<1x16xf32>
    %c3_14 = arith.constant 3 : index
    %c0_15 = arith.constant 0 : index
    %15 = vector.load %arg12[%c3_14, %c0_15] : memref<16x16xf32, #tpu.memory_space<vmem>>, vector<1x16xf32>
    tpu.vector_store %arg12[%c3_14, %c0_15], %14 {strides = array<i32>} : memref<16x16xf32, #tpu.memory_space<vmem>>, vector<1x16xf32>,
    %c1_16 = arith.constant 1 : index
    %c0_17 = arith.constant 0 : index
    %16 = memref.load %arg1[%c1_16, %c0_17] : memref<4x4xi32, #tpu.memory_space<smem>>
    %17 = arith.index_cast %16 : i32 to index
    %c0_18 = arith.constant 0 : index
    %18 = vector.load %arg2[%17, %c0_18] : memref<50x16xf32, #tpu.memory_space<vmem>>, vector<1x16xf32>
    %c4 = arith.constant 4 : index
    %c0_19 = arith.constant 0 : index
    %19 = vector.load %arg12[%c4, %c0_19] : memref<16x16xf32, #tpu.memory_space<vmem>>, vector<1x16xf32>
    tpu.vector_store %arg12[%c4, %c0_19], %18 {strides = array<i32>} : memref<16x16xf32, #tpu.memory_space<vmem>>, vector<1x16xf32>,
    %c1_20 = arith.constant 1 : index
    %c1_21 = arith.constant 1 : index
    %20 = memref.load %arg1[%c1_20, %c1_21] : memref<4x4xi32, #tpu.memory_space<smem>>
    %21 = arith.index_cast %20 : i32 to index
    %c0_22 = arith.constant 0 : index
    %22 = vector.load %arg2[%21, %c0_22] : memref<50x16xf32, #tpu.memory_space<vmem>>, vector<1x16xf32>
    %c5 = arith.constant 5 : index
    %c0_23 = arith.constant 0 : index
    %23 = vector.load %arg12[%c5, %c0_23] : memref<16x16xf32, #tpu.memory_space<vmem>>, vector<1x16xf32>
    tpu.vector_store %arg12[%c5, %c0_23], %22 {strides = array<i32>} : memref<16x16xf32, #tpu.memory_space<vmem>>, vector<1x16xf32>,
    %c1_24 = arith.constant 1 : index
    %c2_25 = arith.constant 2 : index
    %24 = memref.load %arg1[%c1_24, %c2_25] : memref<4x4xi32, #tpu.memory_space<smem>>
    %25 = arith.index_cast %24 : i32 to index
    %c0_26 = arith.constant 0 : index
    %26 = vector.load %arg2[%25, %c0_26] : memref<50x16xf32, #tpu.memory_space<vmem>>, vector<1x16xf32>
    %c6 = arith.constant 6 : index
    %c0_27 = arith.constant 0 : index
    %27 = vector.load %arg12[%c6, %c0_27] : memref<16x16xf32, #tpu.memory_space<vmem>>, vector<1x16xf32>
    tpu.vector_store %arg12[%c6, %c0_27], %26 {strides = array<i32>} : memref<16x16xf32, #tpu.memory_space<vmem>>, vector<1x16xf32>,
    %c1_28 = arith.constant 1 : index
    %c3_29 = arith.constant 3 : index
    %28 = memref.load %arg1[%c1_28, %c3_29] : memref<4x4xi32, #tpu.memory_space<smem>>
    %29 = arith.index_cast %28 : i32 to index
    %c0_30 = arith.constant 0 : index
    %30 = vector.load %arg2[%29, %c0_30] : memref<50x16xf32, #tpu.memory_space<vmem>>, vector<1x16xf32>
    %c7 = arith.constant 7 : index
    %c0_31 = arith.constant 0 : index
    %31 = vector.load %arg12[%c7, %c0_31] : memref<16x16xf32, #tpu.memory_space<vmem>>, vector<1x16xf32>
    tpu.vector_store %arg12[%c7, %c0_31], %30 {strides = array<i32>} : memref<16x16xf32, #tpu.memory_space<vmem>>, vector<1x16xf32>,
    %c2_32 = arith.constant 2 : index
    %c0_33 = arith.constant 0 : index
    %32 = memref.load %arg1[%c2_32, %c0_33] : memref<4x4xi32, #tpu.memory_space<smem>>
    %33 = arith.index_cast %32 : i32 to index
    %c0_34 = arith.constant 0 : index
    %34 = vector.load %arg2[%33, %c0_34] : memref<50x16xf32, #tpu.memory_space<vmem>>, vector<1x16xf32>
    %c8 = arith.constant 8 : index
    %c0_35 = arith.constant 0 : index
    %35 = vector.load %arg12[%c8, %c0_35] : memref<16x16xf32, #tpu.memory_space<vmem>>, vector<1x16xf32>
    tpu.vector_store %arg12[%c8, %c0_35], %34 {strides = array<i32>} : memref<16x16xf32, #tpu.memory_space<vmem>>, vector<1x16xf32>,
    %c2_36 = arith.constant 2 : index
    %c1_37 = arith.constant 1 : index
    %36 = memref.load %arg1[%c2_36, %c1_37] : memref<4x4xi32, #tpu.memory_space<smem>>
    %37 = arith.index_cast %36 : i32 to index
    %c0_38 = arith.constant 0 : index
    %38 = vector.load %arg2[%37, %c0_38] : memref<50x16xf32, #tpu.memory_space<vmem>>, vector<1x16xf32>
    %c9 = arith.constant 9 : index
    %c0_39 = arith.constant 0 : index
    %39 = vector.load %arg12[%c9, %c0_39] : memref<16x16xf32, #tpu.memory_space<vmem>>, vector<1x16xf32>
    tpu.vector_store %arg12[%c9, %c0_39], %38 {strides = array<i32>} : memref<16x16xf32, #tpu.memory_space<vmem>>, vector<1x16xf32>,
    %c2_40 = arith.constant 2 : index
    %c2_41 = arith.constant 2 : index
    %40 = memref.load %arg1[%c2_40, %c2_41] : memref<4x4xi32, #tpu.memory_space<smem>>
    %41 = arith.index_cast %40 : i32 to index
    %c0_42 = arith.constant 0 : index
    %42 = vector.load %arg2[%41, %c0_42] : memref<50x16xf32, #tpu.memory_space<vmem>>, vector<1x16xf32>
    %c10 = arith.constant 10 : index
    %c0_43 = arith.constant 0 : index
    %43 = vector.load %arg12[%c10, %c0_43] : memref<16x16xf32, #tpu.memory_space<vmem>>, vector<1x16xf32>
    tpu.vector_store %arg12[%c10, %c0_43], %42 {strides = array<i32>} : memref<16x16xf32, #tpu.memory_space<vmem>>, vector<1x16xf32>,
    %c2_44 = arith.constant 2 : index
    %c3_45 = arith.constant 3 : index
    %44 = memref.load %arg1[%c2_44, %c3_45] : memref<4x4xi32, #tpu.memory_space<smem>>
    %45 = arith.index_cast %44 : i32 to index
    %c0_46 = arith.constant 0 : index
    %46 = vector.load %arg2[%45, %c0_46] : memref<50x16xf32, #tpu.memory_space<vmem>>, vector<1x16xf32>
    %c11 = arith.constant 11 : index
    %c0_47 = arith.constant 0 : index
    %47 = vector.load %arg12[%c11, %c0_47] : memref<16x16xf32, #tpu.memory_space<vmem>>, vector<1x16xf32>
    tpu.vector_store %arg12[%c11, %c0_47], %46 {strides = array<i32>} : memref<16x16xf32, #tpu.memory_space<vmem>>, vector<1x16xf32>,
    %c3_48 = arith.constant 3 : index
    %c0_49 = arith.constant 0 : index
    %48 = memref.load %arg1[%c3_48, %c0_49] : memref<4x4xi32, #tpu.memory_space<smem>>
    %49 = arith.index_cast %48 : i32 to index
    %c0_50 = arith.constant 0 : index
    %50 = vector.load %arg2[%49, %c0_50] : memref<50x16xf32, #tpu.memory_space<vmem>>, vector<1x16xf32>
    %c12 = arith.constant 12 : index
    %c0_51 = arith.constant 0 : index
    %51 = vector.load %arg12[%c12, %c0_51] : memref<16x16xf32, #tpu.memory_space<vmem>>, vector<1x16xf32>
    tpu.vector_store %arg12[%c12, %c0_51], %50 {strides = array<i32>} : memref<16x16xf32, #tpu.memory_space<vmem>>, vector<1x16xf32>,
    %c3_52 = arith.constant 3 : index
    %c1_53 = arith.constant 1 : index
    %52 = memref.load %arg1[%c3_52, %c1_53] : memref<4x4xi32, #tpu.memory_space<smem>>
    %53 = arith.index_cast %52 : i32 to index
    %c0_54 = arith.constant 0 : index
    %54 = vector.load %arg2[%53, %c0_54] : memref<50x16xf32, #tpu.memory_space<vmem>>, vector<1x16xf32>
    %c13 = arith.constant 13 : index
    %c0_55 = arith.constant 0 : index
    %55 = vector.load %arg12[%c13, %c0_55] : memref<16x16xf32, #tpu.memory_space<vmem>>, vector<1x16xf32>
    tpu.vector_store %arg12[%c13, %c0_55], %54 {strides = array<i32>} : memref<16x16xf32, #tpu.memory_space<vmem>>, vector<1x16xf32>,
    %c3_56 = arith.constant 3 : index
    %c2_57 = arith.constant 2 : index
    %56 = memref.load %arg1[%c3_56, %c2_57] : memref<4x4xi32, #tpu.memory_space<smem>>
    %57 = arith.index_cast %56 : i32 to index
    %c0_58 = arith.constant 0 : index
    %58 = vector.load %arg2[%57, %c0_58] : memref<50x16xf32, #tpu.memory_space<vmem>>, vector<1x16xf32>
    %c14 = arith.constant 14 : index
    %c0_59 = arith.constant 0 : index
    %59 = vector.load %arg12[%c14, %c0_59] : memref<16x16xf32, #tpu.memory_space<vmem>>, vector<1x16xf32>
    tpu.vector_store %arg12[%c14, %c0_59], %58 {strides = array<i32>} : memref<16x16xf32, #tpu.memory_space<vmem>>, vector<1x16xf32>,
    %c3_60 = arith.constant 3 : index
    %c3_61 = arith.constant 3 : index
    %60 = memref.load %arg1[%c3_60, %c3_61] : memref<4x4xi32, #tpu.memory_space<smem>>
    %61 = arith.index_cast %60 : i32 to index
    %c0_62 = arith.constant 0 : index
    %62 = vector.load %arg2[%61, %c0_62] : memref<50x16xf32, #tpu.memory_space<vmem>>, vector<1x16xf32>
    %c15 = arith.constant 15 : index
    %c0_63 = arith.constant 0 : index
    %63 = vector.load %arg12[%c15, %c0_63] : memref<16x16xf32, #tpu.memory_space<vmem>>, vector<1x16xf32>
    tpu.vector_store %arg12[%c15, %c0_63], %62 {strides = array<i32>} : memref<16x16xf32, #tpu.memory_space<vmem>>, vector<1x16xf32>,
    %c0_64 = arith.constant 0 : index
    %c0_65 = arith.constant 0 : index
    %64 = vector.load %arg12[%c0_64, %c0_65] : memref<16x16xf32, #tpu.memory_space<vmem>>, vector<16x16xf32>
    %65 = tpu.iota {dimensions = array<i32: 1>} : vector<4x256xi32>
    %c64_i32 = arith.constant 64 : i32
    %c0_i32 = arith.constant 0 : i32
    %66 = arith.cmpi eq, %c64_i32, %c0_i32 : i32
    %c1_i32 = arith.constant 1 : i32
    %67 = arith.select %66, %c1_i32, %c64_i32 : i32
    %68 = vector.broadcast %67 : i32 to vector<4x256xi32>
    %69 = arith.remsi %65, %68 : vector<4x256xi32>
    %c0_i32_66 = arith.constant 0 : i32
    %70 = vector.broadcast %c0_i32_66 : i32 to vector<4x256xi32>
    %71 = arith.cmpi ne, %69, %70 : vector<4x256xi32>
    %c0_i32_67 = arith.constant 0 : i32
    %72 = vector.broadcast %c0_i32_67 : i32 to vector<4x256xi32>
    %73 = arith.cmpi slt, %69, %72 : vector<4x256xi32>
    %c0_i32_68 = arith.constant 0 : i32
    %74 = arith.cmpi slt, %67, %c0_i32_68 : i32
    %75 = vector.broadcast %74 : i1 to vector<4x256xi1>
    %76 = vector.broadcast %75 : vector<4x256xi1> to vector<4x256xi1>
    %77 = arith.xori %73, %76 : vector<4x256xi1>
    %78 = arith.andi %77, %71 : vector<4x256xi1>
    %79 = vector.broadcast %67 : i32 to vector<4x256xi32>
    %80 = arith.addi %69, %79 : vector<4x256xi32>
    %81 = arith.select %78, %80, %69 : vector<4x256xi1>, vector<4x256xi32>
    %c32_i32 = arith.constant 32 : i32
    %82 = vector.broadcast %c32_i32 : i32 to vector<4x256xi32>
    %83 = arith.cmpi slt, %81, %82 : vector<4x256xi32>
    %84 = tpu.iota {dimensions = array<i32: 1>} : vector<4x64xi32>
    %c32_i32_69 = arith.constant 32 : i32
    %85 = vector.broadcast %c32_i32_69 : i32 to vector<4x64xi32>
    %86 = arith.cmpi slt, %84, %85 : vector<4x64xi32>
    %87 = arith.truncf %64 : vector<16x16xf32> to vector<16x16xbf16>
    %c0_70 = arith.constant 0 : index
    %c0_71 = arith.constant 0 : index
    %88 = vector.load %arg3[%c0_70, %c0_71] : memref<16x256xbf16, #tpu.memory_space<vmem>>, vector<16x256xbf16>
    %cst = arith.constant dense<0.000000e+00> : vector<16x256xf32>
    %89 = tpu.matmul %87, %88, %cst {dimension_numbers = #tpu.dot_dimension_numbers<[1], [0], [0], [1], [0, 0, 1, 1], [], []>} : vector<16x16xbf16>, vector<16x256xbf16>, vector<16x256xf32> -> vector<16x256xf32>
    %c0_72 = arith.constant 0 : index
    %c0_73 = arith.constant 0 : index
    %90 = vector.load %arg5[%c0_72, %c0_73] : memref<1x256xf32, #tpu.memory_space<vmem>>, vector<1x256xf32>
    %91 = vector.broadcast %90 : vector<1x256xf32> to vector<16x256xf32>
    %92 = arith.addf %89, %91 : vector<16x256xf32>
    %93 = vector.extract_strided_slice %92 {offsets = [0, 0], sizes = [4, 256], strides = [1, 1]} : vector<16x256xf32> to vector<4x256xf32>
    %94 = vector.extract_strided_slice %92 {offsets = [4, 0], sizes = [4, 256], strides = [1, 1]} : vector<16x256xf32> to vector<4x256xf32>
    %95 = vector.extract_strided_slice %92 {offsets = [8, 0], sizes = [4, 256], strides = [1, 1]} : vector<16x256xf32> to vector<4x256xf32>
    %96 = vector.extract_strided_slice %92 {offsets = [12, 0], sizes = [4, 256], strides = [1, 1]} : vector<16x256xf32> to vector<4x256xf32>
    %97 = arith.select %83, %93, %96 : vector<4x256xi1>, vector<4x256xf32>
    %98 = arith.select %83, %94, %95 : vector<4x256xi1>, vector<4x256xf32>
    %99 = arith.select %83, %95, %94 : vector<4x256xi1>, vector<4x256xf32>
    %100 = arith.select %83, %96, %93 : vector<4x256xi1>, vector<4x256xf32>
    %c0_74 = arith.constant 0 : index
    %c0_75 = arith.constant 0 : index
    %101 = vector.load %arg4[%c0_74, %c0_75] : memref<64x256xbf16, #tpu.memory_space<vmem>>, vector<64x256xbf16>
    %cst_76 = arith.constant 0.000000e+00 : f32
    %102 = vector.broadcast %cst_76 : f32 to vector<4x64xf32>
    %cst_77 = arith.constant 0.000000e+00 : f32
    %103 = vector.broadcast %cst_77 : f32 to vector<4x64xf32>
    %104 = arith.truncf %102 : vector<4x64xf32> to vector<4x64xbf16>
    %cst_78 = arith.constant dense<0.000000e+00> : vector<4x256xf32>
    %105 = tpu.matmul %104, %101, %cst_78 {dimension_numbers = #tpu.dot_dimension_numbers<[1], [0], [0], [1], [0, 0, 1, 1], [], []>} : vector<4x64xbf16>, vector<64x256xbf16>, vector<4x256xf32> -> vector<4x256xf32>
    %106 = arith.addf %97, %105 : vector<4x256xf32>
    %107 = vector.extract_strided_slice %106 {offsets = [0, 0], sizes = [4, 64], strides = [1, 1]} : vector<4x256xf32> to vector<4x64xf32>
    %108 = arith.negf %107 : vector<4x64xf32>
    %109 = math.exp %108 : vector<4x64xf32>
    %cst_79 = arith.constant 1.000000e+00 : f32
    %110 = vector.broadcast %cst_79 : f32 to vector<4x64xf32>
    %111 = arith.addf %110, %109 : vector<4x64xf32>
    %112 = arith.divf %110, %111 : vector<4x64xf32>
    %113 = vector.extract_strided_slice %106 {offsets = [0, 64], sizes = [4, 64], strides = [1, 1]} : vector<4x256xf32> to vector<4x64xf32>
    %114 = arith.negf %113 : vector<4x64xf32>
    %115 = math.exp %114 : vector<4x64xf32>
    %cst_80 = arith.constant 1.000000e+00 : f32
    %116 = vector.broadcast %cst_80 : f32 to vector<4x64xf32>
    %117 = arith.addf %116, %115 : vector<4x64xf32>
    %118 = arith.divf %116, %117 : vector<4x64xf32>
    %119 = vector.extract_strided_slice %106 {offsets = [0, 128], sizes = [4, 64], strides = [1, 1]} : vector<4x256xf32> to vector<4x64xf32>
    %120 = math.tanh %119 : vector<4x64xf32>
    %121 = vector.extract_strided_slice %106 {offsets = [0, 192], sizes = [4, 64], strides = [1, 1]} : vector<4x256xf32> to vector<4x64xf32>
    %122 = arith.negf %121 : vector<4x64xf32>
    %123 = math.exp %122 : vector<4x64xf32>
    %cst_81 = arith.constant 1.000000e+00 : f32
    %124 = vector.broadcast %cst_81 : f32 to vector<4x64xf32>
    %125 = arith.addf %124, %123 : vector<4x64xf32>
    %126 = arith.divf %124, %125 : vector<4x64xf32>
    %127 = arith.mulf %118, %103 : vector<4x64xf32>
    %128 = arith.mulf %112, %120 : vector<4x64xf32>
    %129 = arith.addf %127, %128 : vector<4x64xf32>
    %130 = math.tanh %129 : vector<4x64xf32>
    %131 = arith.mulf %126, %130 : vector<4x64xf32>
    %132 = arith.truncf %131 : vector<4x64xf32> to vector<4x64xbf16>
    %cst_82 = arith.constant dense<0.000000e+00> : vector<4x256xf32>
    %133 = tpu.matmul %132, %101, %cst_82 {dimension_numbers = #tpu.dot_dimension_numbers<[1], [0], [0], [1], [0, 0, 1, 1], [], []>} : vector<4x64xbf16>, vector<64x256xbf16>, vector<4x256xf32> -> vector<4x256xf32>
    %134 = arith.addf %98, %133 : vector<4x256xf32>
    %135 = vector.extract_strided_slice %134 {offsets = [0, 0], sizes = [4, 64], strides = [1, 1]} : vector<4x256xf32> to vector<4x64xf32>
    %136 = arith.negf %135 : vector<4x64xf32>
    %137 = math.exp %136 : vector<4x64xf32>
    %cst_83 = arith.constant 1.000000e+00 : f32
    %138 = vector.broadcast %cst_83 : f32 to vector<4x64xf32>
    %139 = arith.addf %138, %137 : vector<4x64xf32>
    %140 = arith.divf %138, %139 : vector<4x64xf32>
    %141 = vector.extract_strided_slice %134 {offsets = [0, 64], sizes = [4, 64], strides = [1, 1]} : vector<4x256xf32> to vector<4x64xf32>
    %142 = arith.negf %141 : vector<4x64xf32>
    %143 = math.exp %142 : vector<4x64xf32>
    %cst_84 = arith.constant 1.000000e+00 : f32
    %144 = vector.broadcast %cst_84 : f32 to vector<4x64xf32>
    %145 = arith.addf %144, %143 : vector<4x64xf32>
    %146 = arith.divf %144, %145 : vector<4x64xf32>
    %147 = vector.extract_strided_slice %134 {offsets = [0, 128], sizes = [4, 64], strides = [1, 1]} : vector<4x256xf32> to vector<4x64xf32>
    %148 = math.tanh %147 : vector<4x64xf32>
    %149 = vector.extract_strided_slice %134 {offsets = [0, 192], sizes = [4, 64], strides = [1, 1]} : vector<4x256xf32> to vector<4x64xf32>
    %150 = arith.negf %149 : vector<4x64xf32>
    %151 = math.exp %150 : vector<4x64xf32>
    %cst_85 = arith.constant 1.000000e+00 : f32
    %152 = vector.broadcast %cst_85 : f32 to vector<4x64xf32>
    %153 = arith.addf %152, %151 : vector<4x64xf32>
    %154 = arith.divf %152, %153 : vector<4x64xf32>
    %155 = arith.mulf %146, %129 : vector<4x64xf32>
    %156 = arith.mulf %140, %148 : vector<4x64xf32>
    %157 = arith.addf %155, %156 : vector<4x64xf32>
    %158 = math.tanh %157 : vector<4x64xf32>
    %159 = arith.mulf %154, %158 : vector<4x64xf32>
    %160 = arith.truncf %159 : vector<4x64xf32> to vector<4x64xbf16>
    %cst_86 = arith.constant dense<0.000000e+00> : vector<4x256xf32>
    %161 = tpu.matmul %160, %101, %cst_86 {dimension_numbers = #tpu.dot_dimension_numbers<[1], [0], [0], [1], [0, 0, 1, 1], [], []>} : vector<4x64xbf16>, vector<64x256xbf16>, vector<4x256xf32> -> vector<4x256xf32>
    %162 = arith.addf %99, %161 : vector<4x256xf32>
    %163 = vector.extract_strided_slice %162 {offsets = [0, 0], sizes = [4, 64], strides = [1, 1]} : vector<4x256xf32> to vector<4x64xf32>
    %164 = arith.negf %163 : vector<4x64xf32>
    %165 = math.exp %164 : vector<4x64xf32>
    %cst_87 = arith.constant 1.000000e+00 : f32
    %166 = vector.broadcast %cst_87 : f32 to vector<4x64xf32>
    %167 = arith.addf %166, %165 : vector<4x64xf32>
    %168 = arith.divf %166, %167 : vector<4x64xf32>
    %169 = vector.extract_strided_slice %162 {offsets = [0, 64], sizes = [4, 64], strides = [1, 1]} : vector<4x256xf32> to vector<4x64xf32>
    %170 = arith.negf %169 : vector<4x64xf32>
    %171 = math.exp %170 : vector<4x64xf32>
    %cst_88 = arith.constant 1.000000e+00 : f32
    %172 = vector.broadcast %cst_88 : f32 to vector<4x64xf32>
    %173 = arith.addf %172, %171 : vector<4x64xf32>
    %174 = arith.divf %172, %173 : vector<4x64xf32>
    %175 = vector.extract_strided_slice %162 {offsets = [0, 128], sizes = [4, 64], strides = [1, 1]} : vector<4x256xf32> to vector<4x64xf32>
    %176 = math.tanh %175 : vector<4x64xf32>
    %177 = vector.extract_strided_slice %162 {offsets = [0, 192], sizes = [4, 64], strides = [1, 1]} : vector<4x256xf32> to vector<4x64xf32>
    %178 = arith.negf %177 : vector<4x64xf32>
    %179 = math.exp %178 : vector<4x64xf32>
    %cst_89 = arith.constant 1.000000e+00 : f32
    %180 = vector.broadcast %cst_89 : f32 to vector<4x64xf32>
    %181 = arith.addf %180, %179 : vector<4x64xf32>
    %182 = arith.divf %180, %181 : vector<4x64xf32>
    %183 = arith.mulf %174, %157 : vector<4x64xf32>
    %184 = arith.mulf %168, %176 : vector<4x64xf32>
    %185 = arith.addf %183, %184 : vector<4x64xf32>
    %186 = math.tanh %185 : vector<4x64xf32>
    %187 = arith.mulf %182, %186 : vector<4x64xf32>
    %188 = arith.truncf %187 : vector<4x64xf32> to vector<4x64xbf16>
    %cst_90 = arith.constant dense<0.000000e+00> : vector<4x256xf32>
    %189 = tpu.matmul %188, %101, %cst_90 {dimension_numbers = #tpu.dot_dimension_numbers<[1], [0], [0], [1], [0, 0, 1, 1], [], []>} : vector<4x64xbf16>, vector<64x256xbf16>, vector<4x256xf32> -> vector<4x256xf32>
    %190 = arith.addf %100, %189 : vector<4x256xf32>
    %191 = vector.extract_strided_slice %190 {offsets = [0, 0], sizes = [4, 64], strides = [1, 1]} : vector<4x256xf32> to vector<4x64xf32>
    %192 = arith.negf %191 : vector<4x64xf32>
    %193 = math.exp %192 : vector<4x64xf32>
    %cst_91 = arith.constant 1.000000e+00 : f32
    %194 = vector.broadcast %cst_91 : f32 to vector<4x64xf32>
    %195 = arith.addf %194, %193 : vector<4x64xf32>
    %196 = arith.divf %194, %195 : vector<4x64xf32>
    %197 = vector.extract_strided_slice %190 {offsets = [0, 64], sizes = [4, 64], strides = [1, 1]} : vector<4x256xf32> to vector<4x64xf32>
    %198 = arith.negf %197 : vector<4x64xf32>
    %199 = math.exp %198 : vector<4x64xf32>
    %cst_92 = arith.constant 1.000000e+00 : f32
    %200 = vector.broadcast %cst_92 : f32 to vector<4x64xf32>
    %201 = arith.addf %200, %199 : vector<4x64xf32>
    %202 = arith.divf %200, %201 : vector<4x64xf32>
    %203 = vector.extract_strided_slice %190 {offsets = [0, 128], sizes = [4, 64], strides = [1, 1]} : vector<4x256xf32> to vector<4x64xf32>
    %204 = math.tanh %203 : vector<4x64xf32>
    %205 = vector.extract_strided_slice %190 {offsets = [0, 192], sizes = [4, 64], strides = [1, 1]} : vector<4x256xf32> to vector<4x64xf32>
    %206 = arith.negf %205 : vector<4x64xf32>
    %207 = math.exp %206 : vector<4x64xf32>
    %cst_93 = arith.constant 1.000000e+00 : f32
    %208 = vector.broadcast %cst_93 : f32 to vector<4x64xf32>
    %209 = arith.addf %208, %207 : vector<4x64xf32>
    %210 = arith.divf %208, %209 : vector<4x64xf32>
    %211 = arith.mulf %202, %185 : vector<4x64xf32>
    %212 = arith.mulf %196, %204 : vector<4x64xf32>
    %213 = arith.addf %211, %212 : vector<4x64xf32>
    %214 = math.tanh %213 : vector<4x64xf32>
    %215 = arith.mulf %210, %214 : vector<4x64xf32>
    %216 = arith.select %86, %131, %215 : vector<4x64xi1>, vector<4x64xf32>
    %217 = arith.select %86, %159, %187 : vector<4x64xi1>, vector<4x64xf32>
    %218 = arith.select %86, %187, %159 : vector<4x64xi1>, vector<4x64xf32>
    %219 = arith.select %86, %215, %131 : vector<4x64xi1>, vector<4x64xf32>
    %220 = tpu.concatenate %216, %217, %218, %219 in 0 : vector<4x64xf32>, vector<4x64xf32>, vector<4x64xf32>, vector<4x64xf32> -> vector<16x64xf32>
    %221 = arith.truncf %220 : vector<16x64xf32> to vector<16x64xbf16>
    %c0_94 = arith.constant 0 : index
    %c0_95 = arith.constant 0 : index
    %222 = vector.load %arg6[%c0_94, %c0_95] : memref<64x256xbf16, #tpu.memory_space<vmem>>, vector<64x256xbf16>
    %cst_96 = arith.constant dense<0.000000e+00> : vector<16x256xf32>
    %223 = tpu.matmul %221, %222, %cst_96 {dimension_numbers = #tpu.dot_dimension_numbers<[1], [0], [0], [1], [0, 0, 1, 1], [], []>} : vector<16x64xbf16>, vector<64x256xbf16>, vector<16x256xf32> -> vector<16x256xf32>
    %c0_97 = arith.constant 0 : index
    %c0_98 = arith.constant 0 : index
    %224 = vector.load %arg8[%c0_97, %c0_98] : memref<1x256xf32, #tpu.memory_space<vmem>>, vector<1x256xf32>
    %225 = vector.broadcast %224 : vector<1x256xf32> to vector<16x256xf32>
    %226 = arith.addf %223, %225 : vector<16x256xf32>
    %227 = vector.extract_strided_slice %226 {offsets = [0, 0], sizes = [4, 256], strides = [1, 1]} : vector<16x256xf32> to vector<4x256xf32>
    %228 = vector.extract_strided_slice %226 {offsets = [4, 0], sizes = [4, 256], strides = [1, 1]} : vector<16x256xf32> to vector<4x256xf32>
    %229 = vector.extract_strided_slice %226 {offsets = [8, 0], sizes = [4, 256], strides = [1, 1]} : vector<16x256xf32> to vector<4x256xf32>
    %230 = vector.extract_strided_slice %226 {offsets = [12, 0], sizes = [4, 256], strides = [1, 1]} : vector<16x256xf32> to vector<4x256xf32>
    %231 = arith.select %83, %227, %230 : vector<4x256xi1>, vector<4x256xf32>
    %232 = arith.select %83, %228, %229 : vector<4x256xi1>, vector<4x256xf32>
    %233 = arith.select %83, %229, %228 : vector<4x256xi1>, vector<4x256xf32>
    %234 = arith.select %83, %230, %227 : vector<4x256xi1>, vector<4x256xf32>
    %c0_99 = arith.constant 0 : index
    %c0_100 = arith.constant 0 : index
    %235 = vector.load %arg7[%c0_99, %c0_100] : memref<64x256xbf16, #tpu.memory_space<vmem>>, vector<64x256xbf16>
    %cst_101 = arith.constant 0.000000e+00 : f32
    %236 = vector.broadcast %cst_101 : f32 to vector<4x64xf32>
    %cst_102 = arith.constant 0.000000e+00 : f32
    %237 = vector.broadcast %cst_102 : f32 to vector<4x64xf32>
    %238 = arith.truncf %236 : vector<4x64xf32> to vector<4x64xbf16>
    %cst_103 = arith.constant dense<0.000000e+00> : vector<4x256xf32>
    %239 = tpu.matmul %238, %235, %cst_103 {dimension_numbers = #tpu.dot_dimension_numbers<[1], [0], [0], [1], [0, 0, 1, 1], [], []>} : vector<4x64xbf16>, vector<64x256xbf16>, vector<4x256xf32> -> vector<4x256xf32>
    %240 = arith.addf %231, %239 : vector<4x256xf32>
    %241 = vector.extract_strided_slice %240 {offsets = [0, 0], sizes = [4, 64], strides = [1, 1]} : vector<4x256xf32> to vector<4x64xf32>
    %242 = arith.negf %241 : vector<4x64xf32>
    %243 = math.exp %242 : vector<4x64xf32>
    %cst_104 = arith.constant 1.000000e+00 : f32
    %244 = vector.broadcast %cst_104 : f32 to vector<4x64xf32>
    %245 = arith.addf %244, %243 : vector<4x64xf32>
    %246 = arith.divf %244, %245 : vector<4x64xf32>
    %247 = vector.extract_strided_slice %240 {offsets = [0, 64], sizes = [4, 64], strides = [1, 1]} : vector<4x256xf32> to vector<4x64xf32>
    %248 = arith.negf %247 : vector<4x64xf32>
    %249 = math.exp %248 : vector<4x64xf32>
    %cst_105 = arith.constant 1.000000e+00 : f32
    %250 = vector.broadcast %cst_105 : f32 to vector<4x64xf32>
    %251 = arith.addf %250, %249 : vector<4x64xf32>
    %252 = arith.divf %250, %251 : vector<4x64xf32>
    %253 = vector.extract_strided_slice %240 {offsets = [0, 128], sizes = [4, 64], strides = [1, 1]} : vector<4x256xf32> to vector<4x64xf32>
    %254 = math.tanh %253 : vector<4x64xf32>
    %255 = vector.extract_strided_slice %240 {offsets = [0, 192], sizes = [4, 64], strides = [1, 1]} : vector<4x256xf32> to vector<4x64xf32>
    %256 = arith.negf %255 : vector<4x64xf32>
    %257 = math.exp %256 : vector<4x64xf32>
    %cst_106 = arith.constant 1.000000e+00 : f32
    %258 = vector.broadcast %cst_106 : f32 to vector<4x64xf32>
    %259 = arith.addf %258, %257 : vector<4x64xf32>
    %260 = arith.divf %258, %259 : vector<4x64xf32>
    %261 = arith.mulf %252, %237 : vector<4x64xf32>
    %262 = arith.mulf %246, %254 : vector<4x64xf32>
    %263 = arith.addf %261, %262 : vector<4x64xf32>
    %264 = math.tanh %263 : vector<4x64xf32>
    %265 = arith.mulf %260, %264 : vector<4x64xf32>
    %266 = arith.truncf %265 : vector<4x64xf32> to vector<4x64xbf16>
    %cst_107 = arith.constant dense<0.000000e+00> : vector<4x256xf32>
    %267 = tpu.matmul %266, %235, %cst_107 {dimension_numbers = #tpu.dot_dimension_numbers<[1], [0], [0], [1], [0, 0, 1, 1], [], []>} : vector<4x64xbf16>, vector<64x256xbf16>, vector<4x256xf32> -> vector<4x256xf32>
    %268 = arith.addf %232, %267 : vector<4x256xf32>
    %269 = vector.extract_strided_slice %268 {offsets = [0, 0], sizes = [4, 64], strides = [1, 1]} : vector<4x256xf32> to vector<4x64xf32>
    %270 = arith.negf %269 : vector<4x64xf32>
    %271 = math.exp %270 : vector<4x64xf32>
    %cst_108 = arith.constant 1.000000e+00 : f32
    %272 = vector.broadcast %cst_108 : f32 to vector<4x64xf32>
    %273 = arith.addf %272, %271 : vector<4x64xf32>
    %274 = arith.divf %272, %273 : vector<4x64xf32>
    %275 = vector.extract_strided_slice %268 {offsets = [0, 64], sizes = [4, 64], strides = [1, 1]} : vector<4x256xf32> to vector<4x64xf32>
    %276 = arith.negf %275 : vector<4x64xf32>
    %277 = math.exp %276 : vector<4x64xf32>
    %cst_109 = arith.constant 1.000000e+00 : f32
    %278 = vector.broadcast %cst_109 : f32 to vector<4x64xf32>
    %279 = arith.addf %278, %277 : vector<4x64xf32>
    %280 = arith.divf %278, %279 : vector<4x64xf32>
    %281 = vector.extract_strided_slice %268 {offsets = [0, 128], sizes = [4, 64], strides = [1, 1]} : vector<4x256xf32> to vector<4x64xf32>
    %282 = math.tanh %281 : vector<4x64xf32>
    %283 = vector.extract_strided_slice %268 {offsets = [0, 192], sizes = [4, 64], strides = [1, 1]} : vector<4x256xf32> to vector<4x64xf32>
    %284 = arith.negf %283 : vector<4x64xf32>
    %285 = math.exp %284 : vector<4x64xf32>
    %cst_110 = arith.constant 1.000000e+00 : f32
    %286 = vector.broadcast %cst_110 : f32 to vector<4x64xf32>
    %287 = arith.addf %286, %285 : vector<4x64xf32>
    %288 = arith.divf %286, %287 : vector<4x64xf32>
    %289 = arith.mulf %280, %263 : vector<4x64xf32>
    %290 = arith.mulf %274, %282 : vector<4x64xf32>
    %291 = arith.addf %289, %290 : vector<4x64xf32>
    %292 = math.tanh %291 : vector<4x64xf32>
    %293 = arith.mulf %288, %292 : vector<4x64xf32>
    %294 = arith.truncf %293 : vector<4x64xf32> to vector<4x64xbf16>
    %cst_111 = arith.constant dense<0.000000e+00> : vector<4x256xf32>
    %295 = tpu.matmul %294, %235, %cst_111 {dimension_numbers = #tpu.dot_dimension_numbers<[1], [0], [0], [1], [0, 0, 1, 1], [], []>} : vector<4x64xbf16>, vector<64x256xbf16>, vector<4x256xf32> -> vector<4x256xf32>
    %296 = arith.addf %233, %295 : vector<4x256xf32>
    %297 = vector.extract_strided_slice %296 {offsets = [0, 0], sizes = [4, 64], strides = [1, 1]} : vector<4x256xf32> to vector<4x64xf32>
    %298 = arith.negf %297 : vector<4x64xf32>
    %299 = math.exp %298 : vector<4x64xf32>
    %cst_112 = arith.constant 1.000000e+00 : f32
    %300 = vector.broadcast %cst_112 : f32 to vector<4x64xf32>
    %301 = arith.addf %300, %299 : vector<4x64xf32>
    %302 = arith.divf %300, %301 : vector<4x64xf32>
    %303 = vector.extract_strided_slice %296 {offsets = [0, 64], sizes = [4, 64], strides = [1, 1]} : vector<4x256xf32> to vector<4x64xf32>
    %304 = arith.negf %303 : vector<4x64xf32>
    %305 = math.exp %304 : vector<4x64xf32>
    %cst_113 = arith.constant 1.000000e+00 : f32
    %306 = vector.broadcast %cst_113 : f32 to vector<4x64xf32>
    %307 = arith.addf %306, %305 : vector<4x64xf32>
    %308 = arith.divf %306, %307 : vector<4x64xf32>
    %309 = vector.extract_strided_slice %296 {offsets = [0, 128], sizes = [4, 64], strides = [1, 1]} : vector<4x256xf32> to vector<4x64xf32>
    %310 = math.tanh %309 : vector<4x64xf32>
    %311 = vector.extract_strided_slice %296 {offsets = [0, 192], sizes = [4, 64], strides = [1, 1]} : vector<4x256xf32> to vector<4x64xf32>
    %312 = arith.negf %311 : vector<4x64xf32>
    %313 = math.exp %312 : vector<4x64xf32>
    %cst_114 = arith.constant 1.000000e+00 : f32
    %314 = vector.broadcast %cst_114 : f32 to vector<4x64xf32>
    %315 = arith.addf %314, %313 : vector<4x64xf32>
    %316 = arith.divf %314, %315 : vector<4x64xf32>
    %317 = arith.mulf %308, %291 : vector<4x64xf32>
    %318 = arith.mulf %302, %310 : vector<4x64xf32>
    %319 = arith.addf %317, %318 : vector<4x64xf32>
    %320 = math.tanh %319 : vector<4x64xf32>
    %321 = arith.mulf %316, %320 : vector<4x64xf32>
    %322 = arith.truncf %321 : vector<4x64xf32> to vector<4x64xbf16>
    %cst_115 = arith.constant dense<0.000000e+00> : vector<4x256xf32>
    %323 = tpu.matmul %322, %235, %cst_115 {dimension_numbers = #tpu.dot_dimension_numbers<[1], [0], [0], [1], [0, 0, 1, 1], [], []>} : vector<4x64xbf16>, vector<64x256xbf16>, vector<4x256xf32> -> vector<4x256xf32>
    %324 = arith.addf %234, %323 : vector<4x256xf32>
    %325 = vector.extract_strided_slice %324 {offsets = [0, 0], sizes = [4, 64], strides = [1, 1]} : vector<4x256xf32> to vector<4x64xf32>
    %326 = arith.negf %325 : vector<4x64xf32>
    %327 = math.exp %326 : vector<4x64xf32>
    %cst_116 = arith.constant 1.000000e+00 : f32
    %328 = vector.broadcast %cst_116 : f32 to vector<4x64xf32>
    %329 = arith.addf %328, %327 : vector<4x64xf32>
    %330 = arith.divf %328, %329 : vector<4x64xf32>
    %331 = vector.extract_strided_slice %324 {offsets = [0, 64], sizes = [4, 64], strides = [1, 1]} : vector<4x256xf32> to vector<4x64xf32>
    %332 = arith.negf %331 : vector<4x64xf32>
    %333 = math.exp %332 : vector<4x64xf32>
    %cst_117 = arith.constant 1.000000e+00 : f32
    %334 = vector.broadcast %cst_117 : f32 to vector<4x64xf32>
    %335 = arith.addf %334, %333 : vector<4x64xf32>
    %336 = arith.divf %334, %335 : vector<4x64xf32>
    %337 = vector.extract_strided_slice %324 {offsets = [0, 128], sizes = [4, 64], strides = [1, 1]} : vector<4x256xf32> to vector<4x64xf32>
    %338 = math.tanh %337 : vector<4x64xf32>
    %339 = vector.extract_strided_slice %324 {offsets = [0, 192], sizes = [4, 64], strides = [1, 1]} : vector<4x256xf32> to vector<4x64xf32>
    %340 = arith.negf %339 : vector<4x64xf32>
    %341 = math.exp %340 : vector<4x64xf32>
    %cst_118 = arith.constant 1.000000e+00 : f32
    %342 = vector.broadcast %cst_118 : f32 to vector<4x64xf32>
    %343 = arith.addf %342, %341 : vector<4x64xf32>
    %344 = arith.divf %342, %343 : vector<4x64xf32>
    %345 = arith.mulf %336, %319 : vector<4x64xf32>
    %346 = arith.mulf %330, %338 : vector<4x64xf32>
    %347 = arith.addf %345, %346 : vector<4x64xf32>
    %348 = math.tanh %347 : vector<4x64xf32>
    %349 = arith.mulf %344, %348 : vector<4x64xf32>
    %350 = arith.select %86, %349, %265 : vector<4x64xi1>, vector<4x64xf32>
    %351 = arith.truncf %350 : vector<4x64xf32> to vector<4x64xbf16>
    %c0_119 = arith.constant 0 : index
    %c0_120 = arith.constant 0 : index
    %352 = vector.load %arg9[%c0_119, %c0_120] : memref<64x2xbf16, #tpu.memory_space<vmem>>, vector<64x2xbf16>
    %cst_121 = arith.constant dense<0.000000e+00> : vector<4x2xf32>
    %353 = tpu.matmul %351, %352, %cst_121 {dimension_numbers = #tpu.dot_dimension_numbers<[1], [0], [0], [1], [0, 0, 1, 1], [], []>} : vector<4x64xbf16>, vector<64x2xbf16>, vector<4x2xf32> -> vector<4x2xf32>
    %c0_122 = arith.constant 0 : index
    %c0_123 = arith.constant 0 : index
    %354 = vector.load %arg10[%c0_122, %c0_123] : memref<1x2xf32, #tpu.memory_space<vmem>>, vector<1x2xf32>
    %355 = vector.broadcast %354 : vector<1x2xf32> to vector<4x2xf32>
    %356 = arith.addf %353, %355 : vector<4x2xf32>
    %c0_124 = arith.constant 0 : index
    %c0_125 = arith.constant 0 : index
    %357 = vector.load %arg11[%c0_124, %c0_125] : memref<4x2xf32, #tpu.memory_space<vmem>>, vector<4x2xf32>
    tpu.vector_store %arg11[%c0_124, %c0_125], %356 {strides = array<i32>} : memref<4x2xf32, #tpu.memory_space<vmem>>, vector<4x2xf32>,
    return
  }
  func.func @transform_0(%arg0: i32, %arg1: memref<4x4xi32, #tpu.memory_space<smem>>) -> (i32, i32) {
    %c0_i32 = arith.constant 0 : i32
    %c0_i32_0 = arith.constant 0 : i32
    %c0_i32_1 = arith.constant 0 : i32
    return %c0_i32, %c0_i32_0 : i32, i32
  }
  func.func @transform_1(%arg0: i32, %arg1: memref<4x4xi32, #tpu.memory_space<smem>>) -> (i32, i32) {
    %c0_i32 = arith.constant 0 : i32
    %c0_i32_0 = arith.constant 0 : i32
    %c0_i32_1 = arith.constant 0 : i32
    return %c0_i32, %c0_i32_0 : i32, i32
  }
  func.func @transform_2(%arg0: i32, %arg1: memref<4x4xi32, #tpu.memory_space<smem>>) -> (i32, i32) {
    %c0_i32 = arith.constant 0 : i32
    %c0_i32_0 = arith.constant 0 : i32
    %c0_i32_1 = arith.constant 0 : i32
    return %c0_i32, %c0_i32_0 : i32, i32
  }
  func.func @transform_3(%arg0: i32, %arg1: memref<4x4xi32, #tpu.memory_space<smem>>) -> (i32, i32) {
    %c0_i32 = arith.constant 0 : i32
    %c0_i32_0 = arith.constant 0 : i32
    %c0_i32_1 = arith.constant 0 : i32
    return %c0_i32, %c0_i32_0 : i32, i32
  }
  func.func @transform_4(%arg0: i32, %arg1: memref<4x4xi32, #tpu.memory_space<smem>>) -> (i32, i32) {
    %c0_i32 = arith.constant 0 : i32
    %c0_i32_0 = arith.constant 0 : i32
    %c0_i32_1 = arith.constant 0 : i32
    return %c0_i32, %c0_i32_0 : i32, i32
  }
  func.func @transform_5(%arg0: i32, %arg1: memref<4x4xi32, #tpu.memory_space<smem>>) -> (i32, i32) {
    %c0_i32 = arith.constant 0 : i32
    %c0_i32_0 = arith.constant 0 : i32
    %c0_i32_1 = arith.constant 0 : i32
    return %c0_i32, %c0_i32_0 : i32, i32
  }
  func.func @transform_6(%arg0: i32, %arg1: memref<4x4xi32, #tpu.memory_space<smem>>) -> (i32, i32) {
    %c0_i32 = arith.constant 0 : i32
    %c0_i32_0 = arith.constant 0 : i32
    %c0_i32_1 = arith.constant 0 : i32
    return %c0_i32, %c0_i32_0 : i32, i32
  }
  func.func @transform_7(%arg0: i32, %arg1: memref<4x4xi32, #tpu.memory_space<smem>>) -> (i32, i32) {
    %c0_i32 = arith.constant 0 : i32
    %c0_i32_0 = arith.constant 0 : i32
    %c0_i32_1 = arith.constant 0 : i32
    return %c0_i32, %c0_i32_0 : i32, i32
  }
  func.func @transform_8(%arg0: i32, %arg1: memref<4x4xi32, #tpu.memory_space<smem>>) -> (i32, i32) {
    %c0_i32 = arith.constant 0 : i32
    %c0_i32_0 = arith.constant 0 : i32
    %c0_i32_1 = arith.constant 0 : i32
    return %c0_i32, %c0_i32_0 : i32, i32
  }
  func.func @transform_9(%arg0: i32, %arg1: memref<4x4xi32, #tpu.memory_space<smem>>) -> (i32, i32) {
    %c0_i32 = arith.constant 0 : i32
    %c0_i32_0 = arith.constant 0 : i32
    %c0_i32_1 = arith.constant 0 : i32
    return %c0_i32, %c0_i32_0 : i32, i32
  }
}

</mosaic_0001>

<llo_original>
// kernel: tpu_custom_call.1
$region0: #{tpu_custom_call.1}
  #allocation0 [shape = 'u32[]', space=smem, size = 0x4, offset = 0x4, fixed_abs, tag = 'smem constant byte address 0x4 - core index']
  #allocation1 [shape = 'u32[144,128]{1,0:T(1,128)}', space=vmem, size = 0x12000, scoped, tag = 'internal scratch']
  #allocation2 [shape = 'f32[16,16]{1,0:T(8,128)}', space=vmem, size = 0x2000, scoped, tag = 'scratch operand']
  #allocation3 [shape = 's32[1]{0}', space=sflag, size = 0x4, scoped, tag = 'scoped memory for tpu_custom_call.1']
  #allocation4 [shape = 'u8[2048]{0}', space=smem, size = 0x800, scoped, tag = 'prefetched SMEM operand 0']
  %s0 = inlined_call_operand.vmem [shape: s32[4,4], index: 0, kind: input, shape index: {}]
  %s1 = inlined_call_operand.vmem [shape: f32[50,16], index: 1, kind: input, shape index: {}]
  %s2 = inlined_call_operand.vmem [shape: bf16[16,256], index: 2, kind: input, shape index: {}]
  %s3 = inlined_call_operand.vmem [shape: bf16[64,256], index: 3, kind: input, shape index: {}]
  %s4 = inlined_call_operand.vmem [shape: f32[1,256], index: 4, kind: input, shape index: {}]
  %s5 = inlined_call_operand.hbm [shape: bf16[64,256], index: 5, kind: input, shape index: {}]
  %s6 = inlined_call_operand.hbm [shape: bf16[64,256], index: 6, kind: input, shape index: {}]
  %s7 = inlined_call_operand.vmem [shape: f32[1,256], index: 7, kind: input, shape index: {}]
  %s8 = inlined_call_operand.vmem [shape: bf16[64,2], index: 8, kind: input, shape index: {}]
  %s9 = inlined_call_operand.vmem [shape: f32[1,2], index: 9, kind: input, shape index: {}]
  %s10 = inlined_call_operand.vmem [shape: f32[4,2], index: 10, kind: output, shape index: {}]
  %s11 = sld [smem:[#allocation0]]
  $region54: #{tpu_custom_call.1} parent=0
    _
  %s13 = ssub.s32 1, %s11
  %s14 = scalar_select 0, %s13, %s11
  %s15 = sshll.u32 %s0, 4
  %s16 = int_to_ptr.vmem [resolvable:$true] %s15
  %18 = dma.vmem_to_smem %s16, 64, [#allocation4], [#allocation3]
  %19 = dma.done [#allocation3], 64
  %20 = sfence
  $region1: #{tpu_custom_call.1} parent=0
    #allocation5 [shape = 'u8[32768]{0}', space=vmem, size = 0x8000, scoped, tag = 'input window, operand 5, single buffered']
    #allocation6 [shape = 's32[1]{0}', space=sflag, size = 0x4, scoped, tag = 'scoped memory for tpu_custom_call.1']
    #allocation7 [shape = 'u8[32768]{0}', space=vmem, size = 0x8000, scoped, tag = 'input window, operand 6, single buffered']
    #allocation8 [shape = 's32[1]{0}', space=sflag, size = 0x4, scoped, tag = 'scoped memory for tpu_custom_call.1']
    %21 = vsyncpa [#allocation6], 0
    %22 = vsyncpa [#allocation8], 0
    // Predicated region
    $region2: #{tpu_custom_call.1} parent=1 // pred_check
      _
    $region3: #{tpu_custom_call.1} parent=1 // pred_check_branch
      %24 = sbr.rel (0) target = $region5
    $region4: #{tpu_custom_call.1} parent=1 // pred_region
      _
    $region5: #{tpu_custom_call.1} parent=1 // pred_fallthru
      _
    // Predicated region
    $region6: #{tpu_custom_call.1} parent=1 // pred_check
      _
    $region7: #{tpu_custom_call.1} parent=1 // pred_check_branch
      %26 = sbr.rel (0) target = $region9
    $region8: #{tpu_custom_call.1} parent=1 // pred_region
      _
    $region9: #{tpu_custom_call.1} parent=1 // pred_fallthru
      _
    // Predicated region
    $region10: #{tpu_custom_call.1} parent=1 // pred_check
      _
    $region11: #{tpu_custom_call.1} parent=1 // pred_check_branch
      %28 = sbr.rel (0) target = $region13
    $region12: #{tpu_custom_call.1} parent=1 // pred_region
      _
    $region13: #{tpu_custom_call.1} parent=1 // pred_fallthru
      _
    // Predicated region
    $region14: #{tpu_custom_call.1} parent=1 // pred_check
      _
    $region15: #{tpu_custom_call.1} parent=1 // pred_check_branch
      %30 = sbr.rel (0) target = $region17
    $region16: #{tpu_custom_call.1} parent=1 // pred_region
      _
    $region17: #{tpu_custom_call.1} parent=1 // pred_fallthru
      _
    // Predicated region
    $region18: #{tpu_custom_call.1} parent=1 // pred_check
      _
    $region19: #{tpu_custom_call.1} parent=1 // pred_check_branch
      %32 = sbr.rel (0) target = $region21
    $region20: #{tpu_custom_call.1} parent=1 // pred_region
      %s34 = ssub.s32 1024, 1024
      %35 = vsyncadd [#allocation6], %s34
      %s36 = sshll.u32 [#allocation5], 4
      %s37 = int_to_ptr.vmem [resolvable:$true] %s36
      %42 = dma.hbm_to_vmem [thread:$0]  %s5, 1024, %s37, [#allocation6], 128, 128, 8
    $region21: #{tpu_custom_call.1} parent=1 // pred_fallthru
      _
    // Predicated region
    $region22: #{tpu_custom_call.1} parent=1 // pred_check
      _
    $region23: #{tpu_custom_call.1} parent=1 // pred_check_branch
      %44 = sbr.rel (0) target = $region25
    $region24: #{tpu_custom_call.1} parent=1 // pred_region
      %s46 = ssub.s32 1024, 1024
      %47 = vsyncadd [#allocation8], %s46
      %s48 = sshll.u32 [#allocation7], 4
      %s49 = int_to_ptr.vmem [resolvable:$true] %s48
      %54 = dma.hbm_to_vmem [thread:$0]  %s6, 1024, %s49, [#allocation8], 128, 128, 8
    $region25: #{tpu_custom_call.1} parent=1 // pred_fallthru
      _
    // Predicated region
    $region26: #{tpu_custom_call.1} parent=1 // pred_check
      _
    $region27: #{tpu_custom_call.1} parent=1 // pred_check_branch
      %56 = sbr.rel (0) target = $region29
    $region28: #{tpu_custom_call.1} parent=1 // pred_region
      _
    $region29: #{tpu_custom_call.1} parent=1 // pred_fallthru
      _
    // Predicated region
    $region30: #{tpu_custom_call.1} parent=1 // pred_check
      _
    $region31: #{tpu_custom_call.1} parent=1 // pred_check_branch
      %58 = sbr.rel (0) target = $region33
    $region32: #{tpu_custom_call.1} parent=1 // pred_region
      _
    $region33: #{tpu_custom_call.1} parent=1 // pred_fallthru
      _
    // Predicated region
    $region34: #{tpu_custom_call.1} parent=1 // pred_check
      _
    $region35: #{tpu_custom_call.1} parent=1 // pred_check_branch
      %60 = sbr.rel (0) target = $region37
    $region36: #{tpu_custom_call.1} parent=1 // pred_region
      _
    $region37: #{tpu_custom_call.1} parent=1 // pred_fallthru
      _
    // Predicated region
    $region38: #{tpu_custom_call.1} parent=1 // pred_check
      _
    $region39: #{tpu_custom_call.1} parent=1 // pred_check_branch
      %62 = sbr.rel (0) target = $region41
    $region40: #{tpu_custom_call.1} parent=1 // pred_region
      %63 = dma.done [#allocation6], 1024
    $region41: #{tpu_custom_call.1} parent=1 // pred_fallthru
      _
    // Predicated region
    $region42: #{tpu_custom_call.1} parent=1 // pred_check
      _
    $region43: #{tpu_custom_call.1} parent=1 // pred_check_branch
      %65 = sbr.rel (0) target = $region45
    $region44: #{tpu_custom_call.1} parent=1 // pred_region
      %66 = dma.done [#allocation8], 1024
    $region45: #{tpu_custom_call.1} parent=1 // pred_fallthru
      _
    %s68 = sld [smem:[#allocation4]]
    %s69 = scalar_lea.vmem %s1, %s68
    %v70 = vld [vmem:[%s69] sm:$0x1]
    %vm71 = vcmask 122880
    %72 = vst.msk [vmem:[#allocation2] sm:$0x1] %vm71, %v70
    %s73 = sld [smem:[#allocation4 + $0x1]]
    %s74 = scalar_lea.vmem %s1, %s73
    %v75 = vld [vmem:[%s74] sm:$0x1]
    %76 = vst.msk [vmem:[#allocation2 + $0x1] sm:$0x1] %vm71, %v75
    %s77 = sld [smem:[#allocation4 + $0x2]]
    %s78 = scalar_lea.vmem %s1, %s77
    %v79 = vld [vmem:[%s78] sm:$0x1]
    %80 = vst.msk [vmem:[#allocation2 + $0x2] sm:$0x1] %vm71, %v79
    %s81 = sld [smem:[#allocation4 + $0x3]]
    %s82 = scalar_lea.vmem %s1, %s81
    %v83 = vld [vmem:[%s82] sm:$0x1]
    %84 = vst.msk [vmem:[#allocation2 + $0x3] sm:$0x1] %vm71, %v83
    %s85 = sld [smem:[#allocation4 + $0x80]]
    %s86 = scalar_lea.vmem %s1, %s85
    %v87 = vld [vmem:[%s86] sm:$0x1]
    %88 = vst.msk [vmem:[#allocation2 + $0x4] sm:$0x1] %vm71, %v87
    %s89 = sld [smem:[#allocation4 + $0x81]]
    %s90 = scalar_lea.vmem %s1, %s89
    %v91 = vld [vmem:[%s90] sm:$0x1]
    %92 = vst.msk [vmem:[#allocation2 + $0x5] sm:$0x1] %vm71, %v91
    %s93 = sld [smem:[#allocation4 + $0x82]]
    %s94 = scalar_lea.vmem %s1, %s93
    %v95 = vld [vmem:[%s94] sm:$0x1]
    %96 = vst.msk [vmem:[#allocation2 + $0x6] sm:$0x1] %vm71, %v95
    %s97 = sld [smem:[#allocation4 + $0x83]]
    %s98 = scalar_lea.vmem %s1, %s97
    %v99 = vld [vmem:[%s98] sm:$0x1]
    %100 = vst.msk [vmem:[#allocation2 + $0x7] sm:$0x1] %vm71, %v99
    %s101 = sld [smem:[#allocation4 + $0x100]]
    %s102 = scalar_lea.vmem %s1, %s101
    %v103 = vld [vmem:[%s102] sm:$0x1]
    %104 = vst.msk [vmem:[#allocation2 + $0x8] sm:$0x1] %vm71, %v103
    %s105 = sld [smem:[#allocation4 + $0x101]]
    %s106 = scalar_lea.vmem %s1, %s105
    %v107 = vld [vmem:[%s106] sm:$0x1]
    %108 = vst.msk [vmem:[#allocation2 + $0x9] sm:$0x1] %vm71, %v107
    %s109 = sld [smem:[#allocation4 + $0x102]]
    %s110 = scalar_lea.vmem %s1, %s109
    %v111 = vld [vmem:[%s110] sm:$0x1]
    %112 = vst.msk [vmem:[#allocation2 + $0xa] sm:$0x1] %vm71, %v111
    %s113 = sld [smem:[#allocation4 + $0x103]]
    %s114 = scalar_lea.vmem %s1, %s113
    %v115 = vld [vmem:[%s114] sm:$0x1]
    %116 = vst.msk [vmem:[#allocation2 + $0xb] sm:$0x1] %vm71, %v115
    %s117 = sld [smem:[#allocation4 + $0x180]]
    %s118 = scalar_lea.vmem %s1, %s117
    %v119 = vld [vmem:[%s118] sm:$0x1]
    %120 = vst.msk [vmem:[#allocation2 + $0xc] sm:$0x1] %vm71, %v119
    %s121 = sld [smem:[#allocation4 + $0x181]]
    %s122 = scalar_lea.vmem %s1, %s121
    %v123 = vld [vmem:[%s122] sm:$0x1]
    %124 = vst.msk [vmem:[#allocation2 + $0xd] sm:$0x1] %vm71, %v123
    %s125 = sld [smem:[#allocation4 + $0x182]]
    %s126 = scalar_lea.vmem %s1, %s125
    %v127 = vld [vmem:[%s126] sm:$0x1]
    %128 = vst.msk [vmem:[#allocation2 + $0xe] sm:$0x1] %vm71, %v127
    %s129 = sld [smem:[#allocation4 + $0x183]]
    %s130 = scalar_lea.vmem %s1, %s129
    %v131 = vld [vmem:[%s130] sm:$0x1]
    %132 = vst.msk [vmem:[#allocation2 + $0xf] sm:$0x1] %vm71, %v131
    %v133 = vld [vmem:[#allocation2] sm:$0xff]
    %v134 = vld [vmem:[#allocation2 + $0x8] sm:$0xff]
    %v135 = vlaneseq
    %v136 = vand.u32 %v135, 127
    %v137 = vadd.s32 %v136, 128
    %vm138 = vcmp.lt.s32.totalorder %v136, 0
    %v139 = vsub.s32 0, %v136
    %v140 = vsel %vm138, %v139, %v136
    %v141 = vshrl.u32 %v140, 6
    %v142 = vand.u32 %v140, 63
    %v143 = vsub.s32 0, %v142
    %v144 = vsel %vm138, %v143, %v142
    %vm145 = vcmp.lt.s32.totalorder %v137, 0
    %v146 = vsub.s32 0, %v137
    %v147 = vsel %vm145, %v146, %v137
    %v148 = vshrl.u32 %v147, 6
    %v149 = vand.u32 %v147, 63
    %v150 = vsub.s32 0, %v149
    %v151 = vsel %vm145, %v150, %v149
    %vm152 = vcmp.ne.s32.totalorder %v144, 0
    %vm153 = vcmp.ne.s32.totalorder %v151, 0
    %vm154 = vcmp.lt.s32.totalorder %v144, 0
    %vm155 = vcmp.lt.s32.totalorder %v151, 0
    %vm156 = vmand %vm154, %vm152
    %vm157 = vmand %vm155, %vm153
    %v158 = vadd.s32 %v144, 64
    %v159 = vadd.s32 %v151, 64
    %v160 = vsel %vm156, %v158, %v144
    %v161 = vsel %vm157, %v159, %v151
    %vm162 = vcmp.lt.s32.totalorder %v160, 32
    %vm163 = vcmp.lt.s32.totalorder %v161, 32
    %vm164 = vcmp.lt.s32.totalorder %v136, 32
    %v165 = vpack.c.bf16 %v134, %v133
    %v166 = vld [vmem:[%s2] sm:$0xff]
    %v167 = vld [vmem:[%s2 + $0x8] sm:$0xff]
    %v168 = vld [vmem:[%s4] sm:$0x3]
    %v170 = vlaneseq
    %v171 = vshrl.u32 %v170, 7
    %v172 = vsub.s32 0, %v171
    %v173 = vrot.slane %v168, %v172
    %v174 = vlaneseq
    %v175 = vshrl.u32 %v174, 7
    %v176 = vsub.s32 1, %v175
    %v177 = vrot.slane %v168, %v176
    %v182 = vunpack.c.l.b16 %v166
    %v183 = vunpack.c.h.b16 %v166
    %v184 = vunpack.c.l.b16 %v167
    %v185 = vunpack.c.h.b16 %v167
    %v186 = vpack.c.b16 %v184, %v182
    %v187 = vpack.c.b16 %v185, %v183
    %vm190 = vcmask 130048
    %v192 = vsel %vm190, %v165, 0
    %194 = vmatprep.subr.bf16.mxu0 0
    %195 = vmatpush1.bf16.msra.mxu0 0
    %196 = vmatprep.subr.bf16.mxu0 0
    %197 = vmatpush1.bf16.msra.mxu0 0
    %198 = vmatprep.subr.bf16.mxu0 0
    %199 = vmatpush1.bf16.msra.mxu0 0
    %200 = vmatprep.subr.bf16.mxu0 0
    %201 = vmatpush1.bf16.msra.mxu0 0
    %202 = vmatprep.subr.bf16.mxu0 0
    %203 = vmatpush1.bf16.msra.mxu0 0
    %204 = vmatprep.subr.bf16.mxu0 0
    %205 = vmatpush1.bf16.msra.mxu0 0
    %206 = vmatprep.subr.bf16.mxu0 0
    %207 = vmatpush1.bf16.msra.mxu0 0
    %208 = vmatprep.subr.bf16.mxu0 %v187
    %209 = vmatpush1.bf16.msra.mxu0 %v186
    %210 = vmatprep.subr.bf16.mxu0 0
    %211 = vmatpush2.bf16.msra.mxu0 0
    %212 = vmatprep.subr.bf16.mxu0 0
    %213 = vmatpush2.bf16.msra.mxu0 0
    %214 = vmatprep.subr.bf16.mxu0 0
    %215 = vmatpush2.bf16.msra.mxu0 0
    %216 = vmatprep.subr.bf16.mxu0 0
    %217 = vmatpush2.bf16.msra.mxu0 0
    %218 = vmatprep.subr.bf16.mxu0 0
    %219 = vmatpush2.bf16.msra.mxu0 0
    %220 = vmatprep.subr.bf16.mxu0 0
    %221 = vmatpush2.bf16.msra.mxu0 0
    %222 = vmatprep.subr.bf16.mxu0 0
    %223 = vmatpush2.bf16.msra.mxu0 0
    %224 = vmatprep.subr.bf16.mxu0 0
    %225 = vmatpush2.bf16.msra.mxu0 0
    %226 = vmatprep.mubr.bf16.mxu0 0
    %227 = vmatmul.mubr.bf16.gmra.mxu0 %v192
    %v228 = vpop.f32.mrf.mxu0
    %v229 = vadd.f32 %v173, %v228
    %v230 = vpop.f32.mrf.mxu0
    %v231 = vadd.f32 %v177, %v230
    %v232 = vpop.f32.mrf.mxu0
    %v233 = vadd.f32 %v173, %v232
    %v234 = vpop.f32.mrf.mxu0
    %v235 = vadd.f32 %v177, %v234
    %236 = vdwg.mxu0
    %v239 = vrot.slane %v233, 4
    %v240 = vrot.slane %v235, 4
    %v243 = vsel %vm162, %v229, %v239
    %v244 = vsel %vm163, %v231, %v240
    %v247 = vrot.slane %v229, 4
    %v248 = vrot.slane %v231, 4
    %v251 = vsel %vm162, %v233, %v247
    %v252 = vsel %vm163, %v235, %v248
    %v253 = vld [vmem:[%s3] sm:$0xff]
    %v254 = vld [vmem:[%s3 + $0x8] sm:$0xff]
    %v255 = vld [vmem:[%s3 + $0x10] sm:$0xff]
    %v256 = vld [vmem:[%s3 + $0x18] sm:$0xff]
    %v257 = vld [vmem:[%s3 + $0x20] sm:$0xff]
    %v258 = vld [vmem:[%s3 + $0x28] sm:$0xff]
    %v259 = vld [vmem:[%s3 + $0x30] sm:$0xff]
    %v260 = vld [vmem:[%s3 + $0x38] sm:$0xff]
    %v269 = vunpack.c.l.b16 %v253
    %v270 = vunpack.c.h.b16 %v253
    %v271 = vunpack.c.l.b16 %v254
    %v272 = vunpack.c.h.b16 %v254
    %v273 = vunpack.c.l.b16 %v255
    %v274 = vunpack.c.h.b16 %v255
    %v275 = vunpack.c.l.b16 %v256
    %v276 = vunpack.c.h.b16 %v256
    %v277 = vunpack.c.l.b16 %v257
    %v278 = vunpack.c.h.b16 %v257
    %v279 = vunpack.c.l.b16 %v258
    %v280 = vunpack.c.h.b16 %v258
    %v281 = vunpack.c.l.b16 %v259
    %v282 = vunpack.c.h.b16 %v259
    %v283 = vunpack.c.l.b16 %v260
    %v284 = vunpack.c.h.b16 %v260
    %v285 = vpack.c.b16 %v271, %v269
    %v286 = vpack.c.b16 %v272, %v270
    %v287 = vpack.c.b16 %v275, %v273
    %v288 = vpack.c.b16 %v276, %v274
    %v289 = vpack.c.b16 %v279, %v277
    %v290 = vpack.c.b16 %v280, %v278
    %v291 = vpack.c.b16 %v283, %v281
    %v292 = vpack.c.b16 %v284, %v282
    %vm301 = vcmask 523264
    %v303 = vsel %vm301, 0, 0
    %305 = vmatprep.subr.bf16.mxu0 0
    %306 = vmatpush1.bf16.msra.mxu0 0
    %307 = vmatprep.subr.bf16.mxu0 0
    %308 = vmatpush1.bf16.msra.mxu0 0
    %309 = vmatprep.subr.bf16.mxu0 0
    %310 = vmatpush1.bf16.msra.mxu0 0
    %311 = vmatprep.subr.bf16.mxu0 0
    %312 = vmatpush1.bf16.msra.mxu0 0
    %313 = vmatprep.subr.bf16.mxu0 %v292
    %314 = vmatpush1.bf16.msra.mxu0 %v291
    %315 = vmatprep.subr.bf16.mxu0 %v290
    %316 = vmatpush1.bf16.msra.mxu0 %v289
    %317 = vmatprep.subr.bf16.mxu0 %v288
    %318 = vmatpush1.bf16.msra.mxu0 %v287
    %319 = vmatprep.subr.bf16.mxu0 %v286
    %320 = vmatpush1.bf16.msra.mxu0 %v285
    %321 = vmatprep.subr.bf16.mxu0 0
    %322 = vmatpush2.bf16.msra.mxu0 0
    %323 = vmatprep.subr.bf16.mxu0 0
    %324 = vmatpush2.bf16.msra.mxu0 0
    %325 = vmatprep.subr.bf16.mxu0 0
    %326 = vmatpush2.bf16.msra.mxu0 0
    %327 = vmatprep.subr.bf16.mxu0 0
    %328 = vmatpush2.bf16.msra.mxu0 0
    %329 = vmatprep.subr.bf16.mxu0 0
    %330 = vmatpush2.bf16.msra.mxu0 0
    %331 = vmatprep.subr.bf16.mxu0 0
    %332 = vmatpush2.bf16.msra.mxu0 0
    %333 = vmatprep.subr.bf16.mxu0 0
    %334 = vmatpush2.bf16.msra.mxu0 0
    %335 = vmatprep.subr.bf16.mxu0 0
    %336 = vmatpush2.bf16.msra.mxu0 0
    %337 = vmatprep.mubr.bf16.mxu0 0
    %338 = vmatmul.mubr.bf16.gmra.mxu0 %v303
    %v339 = vpop.f32.mrf.mxu0
    %v340 = vadd.f32 0.0, %v339
    %v341 = vpop.f32.mrf.mxu0
    %v342 = vadd.f32 0.0, %v341
    %v343 = vpop.f32.mrf.mxu0
    %v344 = vpop.f32.mrf.mxu0
    %345 = vdwg.mxu0
    %v346 = vadd.f32 %v243, %v340
    %v347 = vadd.f32 %v244, %v342
    %v348 = vxor.u32 %v346, 2147483648
    %v349 = vmul.f32 %v348, 1.442695
    %v350 = vpow.pop %v349
    %v351 = vadd.f32 %v350, 1.0
    %v352 = vrcp.pop %v351
    %v353 = vmul.f32 1.0, %v352
    %v354 = vtanh.pop %v347
    %v355 = vxor.u32 %v347, 2147483648
    %v356 = vmul.f32 %v355, 1.442695
    %v357 = vpow.pop %v356
    %v358 = vadd.f32 %v357, 1.0
    %v359 = vrcp.pop %v358
    %v360 = vmul.f32 1.0, %v359
    %v361 = vmul.f32 %v353, 0.0
    %v362 = vmul.f32 %v353, %v354
    %364 = vrot.lane.b32.xlu0 %v362, 64
    %v365 = vpop.permute.xlu0 %364
    %v367 = vadd.f32 %v361, %v365
    %v368 = vtanh.pop %v367
    %v369 = vmul.f32 %v360, %v368
    %v370 = vpack.c.bf16 %v369, %v369
    %372 = vrot.lane.b32.xlu0 %v370, 64
    %v373 = vpop.permute.xlu0 %372
    %v375 = vsel %vm301, %v373, 0
    %377 = vmatprep.subr.bf16.mxu0 0
    %378 = vmatpush1.bf16.msra.mxu0 0
    %379 = vmatprep.subr.bf16.mxu0 0
    %380 = vmatpush1.bf16.msra.mxu0 0
    %381 = vmatprep.subr.bf16.mxu0 0
    %382 = vmatpush1.bf16.msra.mxu0 0
    %383 = vmatprep.subr.bf16.mxu0 0
    %384 = vmatpush1.bf16.msra.mxu0 0
    %385 = vmatprep.subr.bf16.mxu0 %v292
    %386 = vmatpush1.bf16.msra.mxu0 %v291
    %387 = vmatprep.subr.bf16.mxu0 %v290
    %388 = vmatpush1.bf16.msra.mxu0 %v289
    %389 = vmatprep.subr.bf16.mxu0 %v288
    %390 = vmatpush1.bf16.msra.mxu0 %v287
    %391 = vmatprep.subr.bf16.mxu0 %v286
    %392 = vmatpush1.bf16.msra.mxu0 %v285
    %393 = vmatprep.subr.bf16.mxu0 0
    %394 = vmatpush2.bf16.msra.mxu0 0
    %395 = vmatprep.subr.bf16.mxu0 0
    %396 = vmatpush2.bf16.msra.mxu0 0
    %397 = vmatprep.subr.bf16.mxu0 0
    %398 = vmatpush2.bf16.msra.mxu0 0
    %399 = vmatprep.subr.bf16.mxu0 0
    %400 = vmatpush2.bf16.msra.mxu0 0
    %401 = vmatprep.subr.bf16.mxu0 0
    %402 = vmatpush2.bf16.msra.mxu0 0
    %403 = vmatprep.subr.bf16.mxu0 0
    %404 = vmatpush2.bf16.msra.mxu0 0
    %405 = vmatprep.subr.bf16.mxu0 0
    %406 = vmatpush2.bf16.msra.mxu0 0
    %407 = vmatprep.subr.bf16.mxu0 0
    %408 = vmatpush2.bf16.msra.mxu0 0
    %409 = vmatprep.mubr.bf16.mxu0 0
    %410 = vmatmul.mubr.bf16.gmra.mxu0 %v375
    %v411 = vpop.f32.mrf.mxu0
    %v412 = vadd.f32 0.0, %v411
    %v413 = vpop.f32.mrf.mxu0
    %v414 = vadd.f32 0.0, %v413
    %v415 = vpop.f32.mrf.mxu0
    %v416 = vpop.f32.mrf.mxu0
    %417 = vdwg.mxu0
    %v420 = vrot.slane %v412, 4
    %v421 = vrot.slane %v414, 4
    %v424 = vadd.f32 %v243, %v420
    %v425 = vadd.f32 %v244, %v421
    %v426 = vxor.u32 %v424, 2147483648
    %v427 = vmul.f32 %v426, 1.442695
    %v428 = vpow.pop %v427
    %v429 = vadd.f32 %v428, 1.0
    %v430 = vrcp.pop %v429
    %v431 = vmul.f32 1.0, %v430
    %v432 = vtanh.pop %v425
    %v433 = vxor.u32 %v425, 2147483648
    %v434 = vmul.f32 %v433, 1.442695
    %v435 = vpow.pop %v434
    %v436 = vadd.f32 %v435, 1.0
    %v437 = vrcp.pop %v436
    %v438 = vmul.f32 1.0, %v437
    %v440 = vrot.slane %v367, 4
    %v442 = vmul.f32 %v431, %v440
    %v443 = vmul.f32 %v431, %v432
    %445 = vrot.lane.b32.xlu0 %v443, 64
    %v446 = vpop.permute.xlu0 %445
    %v448 = vadd.f32 %v442, %v446
    %v449 = vtanh.pop %v448
    %v450 = vmul.f32 %v438, %v449
    %v451 = vpack.c.bf16 %v450, %v450
    %v453 = vrot.slane %v451, 2
    %454 = vrot.lane.b32.xlu0 %v453, 64
    %v455 = vpop.permute.xlu0 %454
    %v457 = vsel %vm301, %v455, 0
    %459 = vmatprep.subr.bf16.mxu0 0
    %460 = vmatpush1.bf16.msra.mxu0 0
    %461 = vmatprep.subr.bf16.mxu0 0
    %462 = vmatpush1.bf16.msra.mxu0 0
    %463 = vmatprep.subr.bf16.mxu0 0
    %464 = vmatpush1.bf16.msra.mxu0 0
    %465 = vmatprep.subr.bf16.mxu0 0
    %466 = vmatpush1.bf16.msra.mxu0 0
    %467 = vmatprep.subr.bf16.mxu0 %v292
    %468 = vmatpush1.bf16.msra.mxu0 %v291
    %469 = vmatprep.subr.bf16.mxu0 %v290
    %470 = vmatpush1.bf16.msra.mxu0 %v289
    %471 = vmatprep.subr.bf16.mxu0 %v288
    %472 = vmatpush1.bf16.msra.mxu0 %v287
    %473 = vmatprep.subr.bf16.mxu0 %v286
    %474 = vmatpush1.bf16.msra.mxu0 %v285
    %475 = vmatprep.subr.bf16.mxu0 0
    %476 = vmatpush2.bf16.msra.mxu0 0
    %477 = vmatprep.subr.bf16.mxu0 0
    %478 = vmatpush2.bf16.msra.mxu0 0
    %479 = vmatprep.subr.bf16.mxu0 0
    %480 = vmatpush2.bf16.msra.mxu0 0
    %481 = vmatprep.subr.bf16.mxu0 0
    %482 = vmatpush2.bf16.msra.mxu0 0
    %483 = vmatprep.subr.bf16.mxu0 0
    %484 = vmatpush2.bf16.msra.mxu0 0
    %485 = vmatprep.subr.bf16.mxu0 0
    %486 = vmatpush2.bf16.msra.mxu0 0
    %487 = vmatprep.subr.bf16.mxu0 0
    %488 = vmatpush2.bf16.msra.mxu0 0
    %489 = vmatprep.subr.bf16.mxu0 0
    %490 = vmatpush2.bf16.msra.mxu0 0
    %491 = vmatprep.mubr.bf16.mxu0 0
    %492 = vmatmul.mubr.bf16.gmra.mxu0 %v457
    %v493 = vpop.f32.mrf.mxu0
    %v494 = vadd.f32 0.0, %v493
    %v495 = vpop.f32.mrf.mxu0
    %v496 = vadd.f32 0.0, %v495
    %v497 = vpop.f32.mrf.mxu0
    %v498 = vpop.f32.mrf.mxu0
    %499 = vdwg.mxu0
    %v500 = vadd.f32 %v251, %v494
    %v501 = vadd.f32 %v252, %v496
    %v502 = vxor.u32 %v500, 2147483648
    %v503 = vmul.f32 %v502, 1.442695
    %v504 = vpow.pop %v503
    %v505 = vadd.f32 %v504, 1.0
    %v506 = vrcp.pop %v505
    %v507 = vmul.f32 1.0, %v506
    %v508 = vtanh.pop %v501
    %v509 = vxor.u32 %v501, 2147483648
    %v510 = vmul.f32 %v509, 1.442695
    %v511 = vpow.pop %v510
    %v512 = vadd.f32 %v511, 1.0
    %v513 = vrcp.pop %v512
    %v514 = vmul.f32 1.0, %v513
    %v516 = vrot.slane %v448, 4
    %v518 = vmul.f32 %v507, %v516
    %v519 = vmul.f32 %v507, %v508
    %521 = vrot.lane.b32.xlu0 %v519, 64
    %v522 = vpop.permute.xlu0 %521
    %v524 = vadd.f32 %v518, %v522
    %v525 = vtanh.pop %v524
    %v526 = vmul.f32 %v514, %v525
    %v527 = vpack.c.bf16 %v526, %v526
    %529 = vrot.lane.b32.xlu0 %v527, 64
    %v530 = vpop.permute.xlu0 %529
    %v532 = vsel %vm301, %v530, 0
    %534 = vmatprep.subr.bf16.mxu0 0
    %535 = vmatpush1.bf16.msra.mxu0 0
    %536 = vmatprep.subr.bf16.mxu0 0
    %537 = vmatpush1.bf16.msra.mxu0 0
    %538 = vmatprep.subr.bf16.mxu0 0
    %539 = vmatpush1.bf16.msra.mxu0 0
    %540 = vmatprep.subr.bf16.mxu0 0
    %541 = vmatpush1.bf16.msra.mxu0 0
    %542 = vmatprep.subr.bf16.mxu0 %v292
    %543 = vmatpush1.bf16.msra.mxu0 %v291
    %544 = vmatprep.subr.bf16.mxu0 %v290
    %545 = vmatpush1.bf16.msra.mxu0 %v289
    %546 = vmatprep.subr.bf16.mxu0 %v288
    %547 = vmatpush1.bf16.msra.mxu0 %v287
    %548 = vmatprep.subr.bf16.mxu0 %v286
    %549 = vmatpush1.bf16.msra.mxu0 %v285
    %550 = vmatprep.subr.bf16.mxu0 0
    %551 = vmatpush2.bf16.msra.mxu0 0
    %552 = vmatprep.subr.bf16.mxu0 0
    %553 = vmatpush2.bf16.msra.mxu0 0
    %554 = vmatprep.subr.bf16.mxu0 0
    %555 = vmatpush2.bf16.msra.mxu0 0
    %556 = vmatprep.subr.bf16.mxu0 0
    %557 = vmatpush2.bf16.msra.mxu0 0
    %558 = vmatprep.subr.bf16.mxu0 0
    %559 = vmatpush2.bf16.msra.mxu0 0
    %560 = vmatprep.subr.bf16.mxu0 0
    %561 = vmatpush2.bf16.msra.mxu0 0
    %562 = vmatprep.subr.bf16.mxu0 0
    %563 = vmatpush2.bf16.msra.mxu0 0
    %564 = vmatprep.subr.bf16.mxu0 0
    %565 = vmatpush2.bf16.msra.mxu0 0
    %566 = vmatprep.mubr.bf16.mxu0 0
    %567 = vmatmul.mubr.bf16.gmra.mxu0 %v532
    %v568 = vpop.f32.mrf.mxu0
    %v569 = vadd.f32 0.0, %v568
    %v570 = vpop.f32.mrf.mxu0
    %v571 = vadd.f32 0.0, %v570
    %v572 = vpop.f32.mrf.mxu0
    %v573 = vpop.f32.mrf.mxu0
    %574 = vdwg.mxu0
    %v577 = vrot.slane %v569, 4
    %v578 = vrot.slane %v571, 4
    %v581 = vadd.f32 %v251, %v577
    %v582 = vadd.f32 %v252, %v578
    %v583 = vxor.u32 %v581, 2147483648
    %v584 = vmul.f32 %v583, 1.442695
    %v585 = vpow.pop %v584
    %v586 = vadd.f32 %v585, 1.0
    %v587 = vrcp.pop %v586
    %v588 = vmul.f32 1.0, %v587
    %v589 = vtanh.pop %v582
    %v590 = vxor.u32 %v582, 2147483648
    %v591 = vmul.f32 %v590, 1.442695
    %v592 = vpow.pop %v591
    %v593 = vadd.f32 %v592, 1.0
    %v594 = vrcp.pop %v593
    %v595 = vmul.f32 1.0, %v594
    %v597 = vrot.slane %v524, 4
    %v599 = vmul.f32 %v588, %v597
    %v600 = vmul.f32 %v588, %v589
    %602 = vrot.lane.b32.xlu0 %v600, 64
    %v603 = vpop.permute.xlu0 %602
    %v605 = vadd.f32 %v599, %v603
    %v606 = vtanh.pop %v605
    %v607 = vmul.f32 %v595, %v606
    %609 = vrot.lane.b32.xlu0 %v369, 64
    %v610 = vpop.permute.xlu0 %609
    %v613 = vrot.slane %v607, 4
    %614 = vrot.lane.b32.xlu0 %v613, 64
    %v615 = vpop.permute.xlu0 %614
    %v617 = vsel %vm164, %v610, %v615
    %v619 = vrot.slane %v450, 4
    %620 = vrot.lane.b32.xlu0 %v619, 64
    %v621 = vpop.permute.xlu0 %620
    %624 = vrot.lane.b32.xlu0 %v526, 64
    %v625 = vpop.permute.xlu0 %624
    %v627 = vsel %vm164, %v621, %v625
    %v628 = vsel %vm164, %v625, %v621
    %v629 = vsel %vm164, %v615, %v610
    %v631 = vrot.slane %v627, 4
    %v634 = vrot.slane %v629, 4
    %vm636 = vcmask 1043456
    %v637 = vsel %vm636, %v617, %v631
    %v638 = vsel %vm636, %v628, %v634
    %v639 = vpack.c.bf16 %v638, %v637
    %v640 = vld [vmem:[#allocation5] sm:$0xff]
    %v641 = vld [vmem:[#allocation5 + $0x8] sm:$0xff]
    %v642 = vld [vmem:[#allocation5 + $0x10] sm:$0xff]
    %v643 = vld [vmem:[#allocation5 + $0x18] sm:$0xff]
    %v644 = vld [vmem:[#allocation5 + $0x20] sm:$0xff]
    %v645 = vld [vmem:[#allocation5 + $0x28] sm:$0xff]
    %v646 = vld [vmem:[#allocation5 + $0x30] sm:$0xff]
    %v647 = vld [vmem:[#allocation5 + $0x38] sm:$0xff]
    %v648 = vld [vmem:[%s7] sm:$0x3]
    %v650 = vlaneseq
    %v651 = vshrl.u32 %v650, 7
    %v652 = vsub.s32 0, %v651
    %v653 = vrot.slane %v648, %v652
    %v654 = vlaneseq
    %v655 = vshrl.u32 %v654, 7
    %v656 = vsub.s32 1, %v655
    %v657 = vrot.slane %v648, %v656
    %v668 = vunpack.c.l.b16 %v640
    %v669 = vunpack.c.h.b16 %v640
    %v670 = vunpack.c.l.b16 %v641
    %v671 = vunpack.c.h.b16 %v641
    %v672 = vunpack.c.l.b16 %v642
    %v673 = vunpack.c.h.b16 %v642
    %v674 = vunpack.c.l.b16 %v643
    %v675 = vunpack.c.h.b16 %v643
    %v676 = vunpack.c.l.b16 %v644
    %v677 = vunpack.c.h.b16 %v644
    %v678 = vunpack.c.l.b16 %v645
    %v679 = vunpack.c.h.b16 %v645
    %v680 = vunpack.c.l.b16 %v646
    %v681 = vunpack.c.h.b16 %v646
    %v682 = vunpack.c.l.b16 %v647
    %v683 = vunpack.c.h.b16 %v647
    %v684 = vpack.c.b16 %v670, %v668
    %v685 = vpack.c.b16 %v671, %v669
    %v686 = vpack.c.b16 %v674, %v672
    %v687 = vpack.c.b16 %v675, %v673
    %v688 = vpack.c.b16 %v678, %v676
    %v689 = vpack.c.b16 %v679, %v677
    %v690 = vpack.c.b16 %v682, %v680
    %v691 = vpack.c.b16 %v683, %v681
    %v701 = vsel %vm301, %v639, 0
    %703 = vmatprep.subr.bf16.mxu0 0
    %704 = vmatpush1.bf16.msra.mxu0 0
    %705 = vmatprep.subr.bf16.mxu0 0
    %706 = vmatpush1.bf16.msra.mxu0 0
    %707 = vmatprep.subr.bf16.mxu0 0
    %708 = vmatpush1.bf16.msra.mxu0 0
    %709 = vmatprep.subr.bf16.mxu0 0
    %710 = vmatpush1.bf16.msra.mxu0 0
    %711 = vmatprep.subr.bf16.mxu0 %v691
    %712 = vmatpush1.bf16.msra.mxu0 %v690
    %713 = vmatprep.subr.bf16.mxu0 %v689
    %714 = vmatpush1.bf16.msra.mxu0 %v688
    %715 = vmatprep.subr.bf16.mxu0 %v687
    %716 = vmatpush1.bf16.msra.mxu0 %v686
    %717 = vmatprep.subr.bf16.mxu0 %v685
    %718 = vmatpush1.bf16.msra.mxu0 %v684
    %719 = vmatprep.subr.bf16.mxu0 0
    %720 = vmatpush2.bf16.msra.mxu0 0
    %721 = vmatprep.subr.bf16.mxu0 0
    %722 = vmatpush2.bf16.msra.mxu0 0
    %723 = vmatprep.subr.bf16.mxu0 0
    %724 = vmatpush2.bf16.msra.mxu0 0
    %725 = vmatprep.subr.bf16.mxu0 0
    %726 = vmatpush2.bf16.msra.mxu0 0
    %727 = vmatprep.subr.bf16.mxu0 0
    %728 = vmatpush2.bf16.msra.mxu0 0
    %729 = vmatprep.subr.bf16.mxu0 0
    %730 = vmatpush2.bf16.msra.mxu0 0
    %731 = vmatprep.subr.bf16.mxu0 0
    %732 = vmatpush2.bf16.msra.mxu0 0
    %733 = vmatprep.subr.bf16.mxu0 0
    %734 = vmatpush2.bf16.msra.mxu0 0
    %735 = vmatprep.mubr.bf16.mxu0 0
    %736 = vmatmul.mubr.bf16.gmra.mxu0 %v701
    %v737 = vpop.f32.mrf.mxu0
    %v738 = vadd.f32 %v653, %v737
    %v739 = vpop.f32.mrf.mxu0
    %v740 = vadd.f32 %v657, %v739
    %v741 = vpop.f32.mrf.mxu0
    %v742 = vadd.f32 %v653, %v741
    %v743 = vpop.f32.mrf.mxu0
    %v744 = vadd.f32 %v657, %v743
    %745 = vdwg.mxu0
    %v748 = vrot.slane %v742, 4
    %v749 = vrot.slane %v744, 4
    %v752 = vsel %vm162, %v738, %v748
    %v753 = vsel %vm163, %v740, %v749
    %v756 = vrot.slane %v738, 4
    %v757 = vrot.slane %v740, 4
    %v760 = vsel %vm162, %v742, %v756
    %v761 = vsel %vm163, %v744, %v757
    %v762 = vld [vmem:[#allocation7] sm:$0xff]
    %v763 = vld [vmem:[#allocation7 + $0x8] sm:$0xff]
    %v764 = vld [vmem:[#allocation7 + $0x10] sm:$0xff]
    %v765 = vld [vmem:[#allocation7 + $0x18] sm:$0xff]
    %v766 = vld [vmem:[#allocation7 + $0x20] sm:$0xff]
    %v767 = vld [vmem:[#allocation7 + $0x28] sm:$0xff]
    %v768 = vld [vmem:[#allocation7 + $0x30] sm:$0xff]
    %v769 = vld [vmem:[#allocation7 + $0x38] sm:$0xff]
    %v778 = vunpack.c.l.b16 %v762
    %v779 = vunpack.c.h.b16 %v762
    %v780 = vunpack.c.l.b16 %v763
    %v781 = vunpack.c.h.b16 %v763
    %v782 = vunpack.c.l.b16 %v764
    %v783 = vunpack.c.h.b16 %v764
    %v784 = vunpack.c.l.b16 %v765
    %v785 = vunpack.c.h.b16 %v765
    %v786 = vunpack.c.l.b16 %v766
    %v787 = vunpack.c.h.b16 %v766
    %v788 = vunpack.c.l.b16 %v767
    %v789 = vunpack.c.h.b16 %v767
    %v790 = vunpack.c.l.b16 %v768
    %v791 = vunpack.c.h.b16 %v768
    %v792 = vunpack.c.l.b16 %v769
    %v793 = vunpack.c.h.b16 %v769
    %v794 = vpack.c.b16 %v780, %v778
    %v795 = vpack.c.b16 %v781, %v779
    %v796 = vpack.c.b16 %v784, %v782
    %v797 = vpack.c.b16 %v785, %v783
    %v798 = vpack.c.b16 %v788, %v786
    %v799 = vpack.c.b16 %v789, %v787
    %v800 = vpack.c.b16 %v792, %v790
    %v801 = vpack.c.b16 %v793, %v791
    %810 = vmatprep.subr.bf16.mxu0 0
    %811 = vmatpush1.bf16.msra.mxu0 0
    %812 = vmatprep.subr.bf16.mxu0 0
    %813 = vmatpush1.bf16.msra.mxu0 0
    %814 = vmatprep.subr.bf16.mxu0 0
    %815 = vmatpush1.bf16.msra.mxu0 0
    %816 = vmatprep.subr.bf16.mxu0 0
    %817 = vmatpush1.bf16.msra.mxu0 0
    %818 = vmatprep.subr.bf16.mxu0 %v801
    %819 = vmatpush1.bf16.msra.mxu0 %v800
    %820 = vmatprep.subr.bf16.mxu0 %v799
    %821 = vmatpush1.bf16.msra.mxu0 %v798
    %822 = vmatprep.subr.bf16.mxu0 %v797
    %823 = vmatpush1.bf16.msra.mxu0 %v796
    %824 = vmatprep.subr.bf16.mxu0 %v795
    %825 = vmatpush1.bf16.msra.mxu0 %v794
    %826 = vmatprep.subr.bf16.mxu0 0
    %827 = vmatpush2.bf16.msra.mxu0 0
    %828 = vmatprep.subr.bf16.mxu0 0
    %829 = vmatpush2.bf16.msra.mxu0 0
    %830 = vmatprep.subr.bf16.mxu0 0
    %831 = vmatpush2.bf16.msra.mxu0 0
    %832 = vmatprep.subr.bf16.mxu0 0
    %833 = vmatpush2.bf16.msra.mxu0 0
    %834 = vmatprep.subr.bf16.mxu0 0
    %835 = vmatpush2.bf16.msra.mxu0 0
    %836 = vmatprep.subr.bf16.mxu0 0
    %837 = vmatpush2.bf16.msra.mxu0 0
    %838 = vmatprep.subr.bf16.mxu0 0
    %839 = vmatpush2.bf16.msra.mxu0 0
    %840 = vmatprep.subr.bf16.mxu0 0
    %841 = vmatpush2.bf16.msra.mxu0 0
    %842 = vmatprep.mubr.bf16.mxu0 0
    %843 = vmatmul.mubr.bf16.gmra.mxu0 %v303
    %v844 = vpop.f32.mrf.mxu0
    %v845 = vadd.f32 0.0, %v844
    %v846 = vpop.f32.mrf.mxu0
    %v847 = vadd.f32 0.0, %v846
    %v848 = vpop.f32.mrf.mxu0
    %v849 = vpop.f32.mrf.mxu0
    %850 = vdwg.mxu0
    %v851 = vadd.f32 %v752, %v845
    %v852 = vadd.f32 %v753, %v847
    %v853 = vxor.u32 %v851, 2147483648
    %v854 = vmul.f32 %v853, 1.442695
    %v855 = vpow.pop %v854
    %v856 = vadd.f32 %v855, 1.0
    %v857 = vrcp.pop %v856
    %v858 = vmul.f32 1.0, %v857
    %v859 = vtanh.pop %v852
    %v860 = vxor.u32 %v852, 2147483648
    %v861 = vmul.f32 %v860, 1.442695
    %v862 = vpow.pop %v861
    %v863 = vadd.f32 %v862, 1.0
    %v864 = vrcp.pop %v863
    %v865 = vmul.f32 1.0, %v864
    %v866 = vmul.f32 %v858, 0.0
    %v867 = vmul.f32 %v858, %v859
    %869 = vrot.lane.b32.xlu0 %v867, 64
    %v870 = vpop.permute.xlu0 %869
    %v872 = vadd.f32 %v866, %v870
    %v873 = vtanh.pop %v872
    %v874 = vmul.f32 %v865, %v873
    %v875 = vpack.c.bf16 %v874, %v874
    %877 = vrot.lane.b32.xlu0 %v875, 64
    %v878 = vpop.permute.xlu0 %877
    %v880 = vsel %vm301, %v878, 0
    %882 = vmatprep.subr.bf16.mxu0 0
    %883 = vmatpush1.bf16.msra.mxu0 0
    %884 = vmatprep.subr.bf16.mxu0 0
    %885 = vmatpush1.bf16.msra.mxu0 0
    %886 = vmatprep.subr.bf16.mxu0 0
    %887 = vmatpush1.bf16.msra.mxu0 0
    %888 = vmatprep.subr.bf16.mxu0 0
    %889 = vmatpush1.bf16.msra.mxu0 0
    %890 = vmatprep.subr.bf16.mxu0 %v801
    %891 = vmatpush1.bf16.msra.mxu0 %v800
    %892 = vmatprep.subr.bf16.mxu0 %v799
    %893 = vmatpush1.bf16.msra.mxu0 %v798
    %894 = vmatprep.subr.bf16.mxu0 %v797
    %895 = vmatpush1.bf16.msra.mxu0 %v796
    %896 = vmatprep.subr.bf16.mxu0 %v795
    %897 = vmatpush1.bf16.msra.mxu0 %v794
    %898 = vmatprep.subr.bf16.mxu0 0
    %899 = vmatpush2.bf16.msra.mxu0 0
    %900 = vmatprep.subr.bf16.mxu0 0
    %901 = vmatpush2.bf16.msra.mxu0 0
    %902 = vmatprep.subr.bf16.mxu0 0
    %903 = vmatpush2.bf16.msra.mxu0 0
    %904 = vmatprep.subr.bf16.mxu0 0
    %905 = vmatpush2.bf16.msra.mxu0 0
    %906 = vmatprep.subr.bf16.mxu0 0
    %907 = vmatpush2.bf16.msra.mxu0 0
    %908 = vmatprep.subr.bf16.mxu0 0
    %909 = vmatpush2.bf16.msra.mxu0 0
    %910 = vmatprep.subr.bf16.mxu0 0
    %911 = vmatpush2.bf16.msra.mxu0 0
    %912 = vmatprep.subr.bf16.mxu0 0
    %913 = vmatpush2.bf16.msra.mxu0 0
    %914 = vmatprep.mubr.bf16.mxu0 0
    %915 = vmatmul.mubr.bf16.gmra.mxu0 %v880
    %v916 = vpop.f32.mrf.mxu0
    %v917 = vadd.f32 0.0, %v916
    %v918 = vpop.f32.mrf.mxu0
    %v919 = vadd.f32 0.0, %v918
    %v920 = vpop.f32.mrf.mxu0
    %v921 = vpop.f32.mrf.mxu0
    %922 = vdwg.mxu0
    %v925 = vrot.slane %v917, 4
    %v926 = vrot.slane %v919, 4
    %v929 = vadd.f32 %v752, %v925
    %v930 = vadd.f32 %v753, %v926
    %v931 = vxor.u32 %v929, 2147483648
    %v932 = vmul.f32 %v931, 1.442695
    %v933 = vpow.pop %v932
    %v934 = vadd.f32 %v933, 1.0
    %v935 = vrcp.pop %v934
    %v936 = vmul.f32 1.0, %v935
    %v937 = vtanh.pop %v930
    %v938 = vxor.u32 %v930, 2147483648
    %v939 = vmul.f32 %v938, 1.442695
    %v940 = vpow.pop %v939
    %v941 = vadd.f32 %v940, 1.0
    %v942 = vrcp.pop %v941
    %v943 = vmul.f32 1.0, %v942
    %v945 = vrot.slane %v872, 4
    %v947 = vmul.f32 %v936, %v945
    %v948 = vmul.f32 %v936, %v937
    %950 = vrot.lane.b32.xlu0 %v948, 64
    %v951 = vpop.permute.xlu0 %950
    %v953 = vadd.f32 %v947, %v951
    %v954 = vtanh.pop %v953
    %v955 = vmul.f32 %v943, %v954
    %v956 = vpack.c.bf16 %v955, %v955
    %v958 = vrot.slane %v956, 2
    %959 = vrot.lane.b32.xlu0 %v958, 64
    %v960 = vpop.permute.xlu0 %959
    %v962 = vsel %vm301, %v960, 0
    %964 = vmatprep.subr.bf16.mxu0 0
    %965 = vmatpush1.bf16.msra.mxu0 0
    %966 = vmatprep.subr.bf16.mxu0 0
    %967 = vmatpush1.bf16.msra.mxu0 0
    %968 = vmatprep.subr.bf16.mxu0 0
    %969 = vmatpush1.bf16.msra.mxu0 0
    %970 = vmatprep.subr.bf16.mxu0 0
    %971 = vmatpush1.bf16.msra.mxu0 0
    %972 = vmatprep.subr.bf16.mxu0 %v801
    %973 = vmatpush1.bf16.msra.mxu0 %v800
    %974 = vmatprep.subr.bf16.mxu0 %v799
    %975 = vmatpush1.bf16.msra.mxu0 %v798
    %976 = vmatprep.subr.bf16.mxu0 %v797
    %977 = vmatpush1.bf16.msra.mxu0 %v796
    %978 = vmatprep.subr.bf16.mxu0 %v795
    %979 = vmatpush1.bf16.msra.mxu0 %v794
    %980 = vmatprep.subr.bf16.mxu0 0
    %981 = vmatpush2.bf16.msra.mxu0 0
    %982 = vmatprep.subr.bf16.mxu0 0
    %983 = vmatpush2.bf16.msra.mxu0 0
    %984 = vmatprep.subr.bf16.mxu0 0
    %985 = vmatpush2.bf16.msra.mxu0 0
    %986 = vmatprep.subr.bf16.mxu0 0
    %987 = vmatpush2.bf16.msra.mxu0 0
    %988 = vmatprep.subr.bf16.mxu0 0
    %989 = vmatpush2.bf16.msra.mxu0 0
    %990 = vmatprep.subr.bf16.mxu0 0
    %991 = vmatpush2.bf16.msra.mxu0 0
    %992 = vmatprep.subr.bf16.mxu0 0
    %993 = vmatpush2.bf16.msra.mxu0 0
    %994 = vmatprep.subr.bf16.mxu0 0
    %995 = vmatpush2.bf16.msra.mxu0 0
    %996 = vmatprep.mubr.bf16.mxu0 0
    %997 = vmatmul.mubr.bf16.gmra.mxu0 %v962
    %v998 = vpop.f32.mrf.mxu0
    %v999 = vadd.f32 0.0, %v998
    %v1000 = vpop.f32.mrf.mxu0
    %v1001 = vadd.f32 0.0, %v1000
    %v1002 = vpop.f32.mrf.mxu0
    %v1003 = vpop.f32.mrf.mxu0
    %1004 = vdwg.mxu0
    %v1005 = vadd.f32 %v760, %v999
    %v1006 = vadd.f32 %v761, %v1001
    %v1007 = vxor.u32 %v1005, 2147483648
    %v1008 = vmul.f32 %v1007, 1.442695
    %v1009 = vpow.pop %v1008
    %v1010 = vadd.f32 %v1009, 1.0
    %v1011 = vrcp.pop %v1010
    %v1012 = vmul.f32 1.0, %v1011
    %v1013 = vtanh.pop %v1006
    %v1014 = vxor.u32 %v1006, 2147483648
    %v1015 = vmul.f32 %v1014, 1.442695
    %v1016 = vpow.pop %v1015
    %v1017 = vadd.f32 %v1016, 1.0
    %v1018 = vrcp.pop %v1017
    %v1019 = vmul.f32 1.0, %v1018
    %v1021 = vrot.slane %v953, 4
    %v1023 = vmul.f32 %v1012, %v1021
    %v1024 = vmul.f32 %v1012, %v1013
    %1026 = vrot.lane.b32.xlu0 %v1024, 64
    %v1027 = vpop.permute.xlu0 %1026
    %v1029 = vadd.f32 %v1023, %v1027
    %v1030 = vtanh.pop %v1029
    %v1031 = vmul.f32 %v1019, %v1030
    %v1032 = vpack.c.bf16 %v1031, %v1031
    %1034 = vrot.lane.b32.xlu0 %v1032, 64
    %v1035 = vpop.permute.xlu0 %1034
    %v1037 = vsel %vm301, %v1035, 0
    %1039 = vmatprep.subr.bf16.mxu0 0
    %1040 = vmatpush1.bf16.msra.mxu0 0
    %1041 = vmatprep.subr.bf16.mxu0 0
    %1042 = vmatpush1.bf16.msra.mxu0 0
    %1043 = vmatprep.subr.bf16.mxu0 0
    %1044 = vmatpush1.bf16.msra.mxu0 0
    %1045 = vmatprep.subr.bf16.mxu0 0
    %1046 = vmatpush1.bf16.msra.mxu0 0
    %1047 = vmatprep.subr.bf16.mxu0 %v801
    %1048 = vmatpush1.bf16.msra.mxu0 %v800
    %1049 = vmatprep.subr.bf16.mxu0 %v799
    %1050 = vmatpush1.bf16.msra.mxu0 %v798
    %1051 = vmatprep.subr.bf16.mxu0 %v797
    %1052 = vmatpush1.bf16.msra.mxu0 %v796
    %1053 = vmatprep.subr.bf16.mxu0 %v795
    %1054 = vmatpush1.bf16.msra.mxu0 %v794
    %1055 = vmatprep.subr.bf16.mxu0 0
    %1056 = vmatpush2.bf16.msra.mxu0 0
    %1057 = vmatprep.subr.bf16.mxu0 0
    %1058 = vmatpush2.bf16.msra.mxu0 0
    %1059 = vmatprep.subr.bf16.mxu0 0
    %1060 = vmatpush2.bf16.msra.mxu0 0
    %1061 = vmatprep.subr.bf16.mxu0 0
    %1062 = vmatpush2.bf16.msra.mxu0 0
    %1063 = vmatprep.subr.bf16.mxu0 0
    %1064 = vmatpush2.bf16.msra.mxu0 0
    %1065 = vmatprep.subr.bf16.mxu0 0
    %1066 = vmatpush2.bf16.msra.mxu0 0
    %1067 = vmatprep.subr.bf16.mxu0 0
    %1068 = vmatpush2.bf16.msra.mxu0 0
    %1069 = vmatprep.subr.bf16.mxu0 0
    %1070 = vmatpush2.bf16.msra.mxu0 0
    %1071 = vmatprep.mubr.bf16.mxu0 0
    %1072 = vmatmul.mubr.bf16.gmra.mxu0 %v1037
    %v1073 = vpop.f32.mrf.mxu0
    %v1074 = vadd.f32 0.0, %v1073
    %v1075 = vpop.f32.mrf.mxu0
    %v1076 = vadd.f32 0.0, %v1075
    %v1077 = vpop.f32.mrf.mxu0
    %v1078 = vpop.f32.mrf.mxu0
    %1079 = vdwg.mxu0
    %v1082 = vrot.slane %v1074, 4
    %v1083 = vrot.slane %v1076, 4
    %v1086 = vadd.f32 %v760, %v1082
    %v1087 = vadd.f32 %v761, %v1083
    %v1088 = vxor.u32 %v1086, 2147483648
    %v1089 = vmul.f32 %v1088, 1.442695
    %v1090 = vpow.pop %v1089
    %v1091 = vadd.f32 %v1090, 1.0
    %v1092 = vrcp.pop %v1091
    %v1093 = vmul.f32 1.0, %v1092
    %v1094 = vtanh.pop %v1087
    %v1095 = vxor.u32 %v1087, 2147483648
    %v1096 = vmul.f32 %v1095, 1.442695
    %v1097 = vpow.pop %v1096
    %v1098 = vadd.f32 %v1097, 1.0
    %v1099 = vrcp.pop %v1098
    %v1100 = vmul.f32 1.0, %v1099
    %v1102 = vrot.slane %v1029, 4
    %v1104 = vmul.f32 %v1093, %v1102
    %v1105 = vmul.f32 %v1093, %v1094
    %1107 = vrot.lane.b32.xlu0 %v1105, 64
    %v1108 = vpop.permute.xlu0 %1107
    %v1110 = vadd.f32 %v1104, %v1108
    %v1111 = vtanh.pop %v1110
    %v1112 = vmul.f32 %v1100, %v1111
    %v1114 = vrot.slane %v1112, 4
    %1115 = vrot.lane.b32.xlu0 %v1114, 64
    %v1116 = vpop.permute.xlu0 %1115
    %1119 = vrot.lane.b32.xlu0 %v874, 64
    %v1120 = vpop.permute.xlu0 %1119
    %v1122 = vsel %vm164, %v1116, %v1120
    %v1123 = vpack.c.bf16 %v1122, %v1122
    %v1124 = vld [vmem:[%s8] sm:$0xf]
    %v1125 = vld [vmem:[%s8 + $0x4] sm:$0xf]
    %v1126 = vld [vmem:[%s8 + $0x8] sm:$0xf]
    %v1127 = vld [vmem:[%s8 + $0xc] sm:$0xf]
    %v1128 = vld [vmem:[%s8 + $0x10] sm:$0xf]
    %v1129 = vld [vmem:[%s8 + $0x14] sm:$0xf]
    %v1130 = vld [vmem:[%s8 + $0x18] sm:$0xf]
    %v1131 = vld [vmem:[%s8 + $0x1c] sm:$0xf]
    %v1132 = vld [vmem:[%s9] sm:$0x1]
    %v1134 = vlaneseq
    %v1135 = vshrl.u32 %v1134, 7
    %v1136 = vsub.s32 0, %v1135
    %v1137 = vrot.slane %v1132, %v1136
    %v1147 = vunpack.c.l.b16 %v1124
    %v1148 = vunpack.c.l.b16 %v1125
    %v1149 = vunpack.c.l.b16 %v1126
    %v1150 = vunpack.c.l.b16 %v1127
    %v1151 = vunpack.c.l.b16 %v1128
    %v1152 = vunpack.c.l.b16 %v1129
    %v1153 = vunpack.c.l.b16 %v1130
    %v1154 = vunpack.c.l.b16 %v1131
    %v1155 = vpack.c.b16 %v1148, %v1147
    %v1156 = vpack.c.b16 %v1150, %v1149
    %v1157 = vpack.c.b16 %v1152, %v1151
    %v1158 = vpack.c.b16 %v1154, %v1153
    %v1164 = vsel %vm301, %v1123, 0
    %1166 = vmatprep.subr.bf16.mxu0 0
    %1167 = vmatpush1.bf16.msra.mxu0 0
    %1168 = vmatprep.subr.bf16.mxu0 0
    %1169 = vmatpush1.bf16.msra.mxu0 0
    %1170 = vmatprep.subr.bf16.mxu0 0
    %1171 = vmatpush1.bf16.msra.mxu0 0
    %1172 = vmatprep.subr.bf16.mxu0 0
    %1173 = vmatpush1.bf16.msra.mxu0 0
    %1174 = vmatprep.subr.bf16.mxu0 0
    %1175 = vmatpush1.bf16.msra.mxu0 %v1158
    %1176 = vmatprep.subr.bf16.mxu0 0
    %1177 = vmatpush1.bf16.msra.mxu0 %v1157
    %1178 = vmatprep.subr.bf16.mxu0 0
    %1179 = vmatpush1.bf16.msra.mxu0 %v1156
    %1180 = vmatprep.subr.bf16.mxu0 0
    %1181 = vmatpush1.bf16.msra.mxu0 %v1155
    %1182 = vmatprep.subr.bf16.mxu0 0
    %1183 = vmatpush2.bf16.msra.mxu0 0
    %1184 = vmatprep.subr.bf16.mxu0 0
    %1185 = vmatpush2.bf16.msra.mxu0 0
    %1186 = vmatprep.subr.bf16.mxu0 0
    %1187 = vmatpush2.bf16.msra.mxu0 0
    %1188 = vmatprep.subr.bf16.mxu0 0
    %1189 = vmatpush2.bf16.msra.mxu0 0
    %1190 = vmatprep.subr.bf16.mxu0 0
    %1191 = vmatpush2.bf16.msra.mxu0 0
    %1192 = vmatprep.subr.bf16.mxu0 0
    %1193 = vmatpush2.bf16.msra.mxu0 0
    %1194 = vmatprep.subr.bf16.mxu0 0
    %1195 = vmatpush2.bf16.msra.mxu0 0
    %1196 = vmatprep.subr.bf16.mxu0 0
    %1197 = vmatpush2.bf16.msra.mxu0 0
    %1198 = vmatprep.mubr.bf16.mxu0 0
    %1199 = vmatmul.mubr.bf16.gmra.mxu0 %v1164
    %v1200 = vpop.f32.mrf.mxu0
    %v1201 = vadd.f32 %v1137, %v1200
    %v1202 = vpop.f32.mrf.mxu0
    %v1203 = vpop.f32.mrf.mxu0
    %v1204 = vpop.f32.mrf.mxu0
    %1205 = vdwg.mxu0
    %vm1206 = vcmask 11264
    %1207 = vst.msk [vmem:[%s10] sm:$0xf] %vm1206, %v1201
    // Predicated region
    $region46: #{tpu_custom_call.1} parent=1 // pred_check
      _
    $region47: #{tpu_custom_call.1} parent=1 // pred_check_branch
      %1209 = sbr.rel (0) target = $region49
    $region48: #{tpu_custom_call.1} parent=1 // pred_region
      _
    $region49: #{tpu_custom_call.1} parent=1 // pred_fallthru
      _
    // Predicated region
    $region50: #{tpu_custom_call.1} parent=1 // pred_check
      _
    $region51: #{tpu_custom_call.1} parent=1 // pred_check_branch
      %1211 = sbr.rel (0) target = $region53
    $region52: #{tpu_custom_call.1} parent=1 // pred_region
      _
    $region53: #{tpu_custom_call.1} parent=1 // pred_fallthru
      _
    %1212 = vsyncpa [#allocation6], 1
    %1213 = vsyncpa [#allocation8], 1

</llo_original>
